<compile_context>
chip_gen: v6e
topology: v6e:2x2x1
jax: 0.10.0
libtpu: 0.0.40
codegen_flags: <defaults>
</compile_context>

<pallas_src>
import math
import functools

import jax
import jax.numpy as jnp
from jax import lax
from jax.experimental import pallas as pl
from jax.experimental.pallas import tpu as pltpu

_VMEM_LIMIT = 48 * 1024 * 1024      # explicit scoped-VMEM limit; safe on v5e/v6e/v7x


def _cp(sem):
    return pltpu.CompilerParams(dimension_semantics=sem,
                                vmem_limit_bytes=_VMEM_LIMIT)


def _rms(x, w, eps):
    # torch RMSNorm: x * rsqrt(mean(x^2, -1) + eps) * weight
    var = jnp.mean(x * x, axis=-1, keepdims=True)
    return x * lax.rsqrt(var + eps) * w


def _pick_tile(total, target, mult):
    if total <= target:
        return total
    for t in range(min(target, total), 0, -1):
        if total % t == 0 and t % mult == 0:
            return t
    return total


# ------------------------------- kernels -----------------------------------

def preattn_kernel(eps, H, Hkv, hd, qk_norm, sm_scale,
                   x_ref, scale_ref, rmsw_ref, wqkv_ref, cos_ref, sin_ref,
                   qnw_ref, knw_ref, q_ref, k_ref, v_ref):
    # per (batch, S-tile): qkv = (RMSNorm1(x) * (1+scale_msa)) @ Wqkv  (bf16 MXU),
    # then per-head qk-RMSNorm + rotate-half RoPE; 1/sqrt(hd) folded into the
    # q-side RoPE tables (one tile-wide mul instead of per-head muls).
    x = x_ref[0]                                             # (tS, D) f32
    h = _rms(x, rmsw_ref[...], eps) * (1.0 + scale_ref[0])   # modulate
    qkv = jnp.dot(h.astype(jnp.bfloat16), wqkv_ref[...],
                  preferred_element_type=jnp.float32)        # (tS, (H+2*Hkv)*hd) f32

    cos2 = cos_ref[...]                                      # (tS, hd) = [cos | cos]
    sin2 = sin_ref[...]                                      # (tS, hd) = [-sin | sin]
    cos_q = cos2 * sm_scale                                  # fold 1/sqrt(hd) into q RoPE
    sin_q = sin2 * sm_scale
    half = hd // 2

    def rope(t, c, s):
        # rotate-half on the de-interleaved layout; roll uses the free XLU slot.
        return t * c + pltpu.roll(t, half, axis=1) * s

    for g in range(H):                                       # queries
        t = qkv[:, g * hd:(g + 1) * hd]
        if qk_norm:
            t = _rms(t, qnw_ref[...], eps)
        q_ref[0, g] = rope(t, cos_q, sin_q).astype(q_ref.dtype)
    for g in range(Hkv):                                     # keys
        t = qkv[:, (H + g) * hd:(H + g + 1) * hd]
        if qk_norm:
            t = _rms(t, knw_ref[...], eps)
        k_ref[0, g] = rope(t, cos2, sin2).astype(k_ref.dtype)
    for g in range(Hkv):                                     # values (passthrough)
        v_ref[0, g] = qkv[:, (H + Hkv + g) * hd:(H + Hkv + g + 1) * hd].astype(v_ref.dtype)


def flash_attn_kernel(q_ref, k_ref, v_ref, bias_ref, o_ref, m_sc, l_sc, acc_sc):
    # per (batch, head, q-tile): online-softmax accumulation over kv tiles.
    ki = pl.program_id(3)

    @pl.when(ki == 0)
    def _():
        m_sc[...] = jnp.full_like(m_sc, -jnp.inf)
        l_sc[...] = jnp.zeros_like(l_sc)
        acc_sc[...] = jnp.zeros_like(acc_sc)

    q = q_ref[0, 0]                                          # (tq, hd) bf16, pre-scaled
    k = k_ref[0, 0]                                          # (tkv, hd) bf16
    s = lax.dot_general(q, k, (((1,), (1,)), ((), ())),      # q @ k^T -> (tq, tkv) f32
                        preferred_element_type=jnp.float32)
    s = s + bias_ref[0]                                      # additive key-mask bias

    m_prev = m_sc[...]
    m_new = jnp.maximum(m_prev, jnp.max(s, axis=-1, keepdims=True))
    alpha = jnp.exp(m_prev - m_new)
    p = jnp.exp(s - m_new)
    l_sc[...] = alpha * l_sc[...] + jnp.sum(p, axis=-1, keepdims=True)
    acc_sc[...] = alpha * acc_sc[...] + jnp.dot(
        p.astype(v_ref.dtype), v_ref[0, 0], preferred_element_type=jnp.float32)
    m_sc[...] = m_new

    @pl.when(ki == pl.num_programs(3) - 1)
    def _():
        o_ref[0, 0] = (acc_sc[...] * pl.reciprocal(l_sc[...], approx=True)
                       ).astype(o_ref.dtype)


def postattn_kernel(eps, H, x_ref, a_ref, wo_ref, rmsw_ref, gate_ref, o_ref):
    # per (batch, S-tile): x + tanh(gate_msa) * RMSNorm2( sum_h attn_h @ Wo_h )
    tS, D = x_ref.shape[1], x_ref.shape[2]
    acc = jnp.zeros((tS, D), jnp.float32)
    for hh in range(H):                                      # head-major, no transpose
        acc = acc + jnp.dot(a_ref[0, hh], wo_ref[hh],
                            preferred_element_type=jnp.float32)
    n = _rms(acc, rmsw_ref[...], eps)
    o_ref[0] = x_ref[0] + jnp.tanh(gate_ref[0]) * n


def ffn_kernel(eps, x_ref, scale_ref, gate_ref, r1_ref, r2_ref,
               w1_ref, w3_ref, w2_ref, o_ref, hmod_sc, acc_sc):
    # per (batch, S-tile): hidden-dim-tiled SwiGLU with an f32 VMEM accumulator.
    hi = pl.program_id(2)

    @pl.when(hi == 0)
    def _():
        h = _rms(x_ref[0], r1_ref[...], eps) * (1.0 + scale_ref[0])
        hmod_sc[...] = h.astype(hmod_sc.dtype)
        acc_sc[...] = jnp.zeros_like(acc_sc)

    h = hmod_sc[...]                                         # (tS, D) bf16
    a = jnp.dot(h, w1_ref[...], preferred_element_type=jnp.float32)
    b = jnp.dot(h, w3_ref[...], preferred_element_type=jnp.float32)
    f = (a * jax.nn.sigmoid(a)) * b                          # SiLU(h@w1) * (h@w3)
    acc_sc[...] += jnp.dot(f.astype(jnp.bfloat16), w2_ref[...],
                           preferred_element_type=jnp.float32)

    @pl.when(hi == pl.num_programs(2) - 1)
    def _():
        n = _rms(acc_sc[...], r2_ref[...], eps)
        o_ref[0] = x_ref[0] + jnp.tanh(gate_ref[0]) * n


# ----------------------------- parameter prep -------------------------------

def prepare_params(p, cfg):
    """One-time weight shuffle: fold the RoPE de-interleave perm into Wqkv's q/k
    column blocks and the q/k norm weights, reshape Wo head-major, cast to bf16."""
    H, Hkv, hd = cfg["n_heads"], cfg["n_kv_heads"], cfg["head_dim"]
    D = p["attn_norm1_w"].shape[0]
    perm = jnp.concatenate([jnp.arange(0, hd, 2), jnp.arange(1, hd, 2)])
    wqkv = p["wqkv_t"]
    wq = wqkv[:, :H * hd].reshape(D, H, hd)[:, :, perm].reshape(D, H * hd)
    wk = wqkv[:, H * hd:(H + Hkv) * hd].reshape(D, Hkv, hd)[:, :, perm].reshape(D, Hkv * hd)
    wv = wqkv[:, (H + Hkv) * hd:]
    bf = jnp.bfloat16
    return {
        "wqkv_t": jnp.concatenate([wq, wk, wv], axis=1).astype(bf),
        "wo_h": p["wo_t"].reshape(H, hd, D).astype(bf),
        "w1_t": p["w1_t"].astype(bf),
        "w3_t": p["w3_t"].astype(bf),
        "w2_t": p["w2_t"].astype(bf),
        "q_norm_w": p["q_norm_w"][perm][None, :].astype(jnp.float32),
        "k_norm_w": p["k_norm_w"][perm][None, :].astype(jnp.float32),
        "attn_norm1_w": p["attn_norm1_w"][None, :],
        "attn_norm2_w": p["attn_norm2_w"][None, :],
        "ffn_norm1_w": p["ffn_norm1_w"][None, :],
        "ffn_norm2_w": p["ffn_norm2_w"][None, :],
        "ada_w_t": p["ada_w_t"],
        "ada_b": p["ada_b"],
    }


# ------------------------------- wrapper ------------------------------------

def joint_transformer_block(x, x_mask, cos, sin, adaln_input, p, cfg):
    B, S, D = x.shape
    H, Hkv, hd = cfg["n_heads"], cfg["n_kv_heads"], cfg["head_dim"]
    eps = cfg["eps"]
    n_rep = H // Hkv
    qkv_dim = (H + 2 * Hkv) * hd
    hidden = p["w1_t"].shape[1]
    bf = jnp.bfloat16

    tS = cfg.get("ts") or _pick_tile(S, 256, 8)
    tq = cfg.get("tq") or _pick_tile(S, 256, 8)
    tkv = cfg.get("tkv") or _pick_tile(S, 512, 128)
    th = cfg.get("th") or _pick_tile(hidden, 512, 128)
    nS, nQ, nK, nH = S // tS, S // tq, S // tkv, hidden // th

    # adaLN modulation: tiny (B, dmin) @ (dmin, 4D) -> plain jnp.
    a = adaln_input
    ada = (a * jax.nn.sigmoid(a)) @ p["ada_w_t"] + p["ada_b"]
    scale_msa, gate_msa, scale_mlp, gate_mlp = jnp.split(ada, 4, axis=-1)
    scale_msa = scale_msa[:, None, :]
    gate_msa = gate_msa[:, None, :]
    scale_mlp = scale_mlp[:, None, :]
    gate_mlp = gate_mlp[:, None, :]

    # rotate-half RoPE tables (S, hd) and additive key-mask bias (B, 1, S).
    cos2 = jnp.concatenate([cos, cos], axis=-1)
    sin2 = jnp.concatenate([-sin, sin], axis=-1)
    bias = jnp.where(x_mask > 0.5, 0.0, -1e30).astype(jnp.float32)[:, None, :]

    # ---- 1) RMSNorm1 + modulate + QKV + qk-norm + RoPE -> head-major bf16 q/k/v
    q, k, v = pl.pallas_call(
        functools.partial(preattn_kernel, eps, H, Hkv, hd, cfg["qk_norm"],
                          1.0 / math.sqrt(hd)),
        grid=(B, nS),
        out_shape=(jax.ShapeDtypeStruct((B, H, S, hd), bf),
                   jax.ShapeDtypeStruct((B, Hkv, S, hd), bf),
                   jax.ShapeDtypeStruct((B, Hkv, S, hd), bf)),
        in_specs=[
            pl.BlockSpec((1, tS, D), lambda b, s_: (b, s_, 0)),
            pl.BlockSpec((1, 1, D), lambda b, s_: (b, 0, 0)),
            pl.BlockSpec((1, D), lambda b, s_: (0, 0)),
            pl.BlockSpec((D, qkv_dim), lambda b, s_: (0, 0)),
            pl.BlockSpec((tS, hd), lambda b, s_: (s_, 0)),
            pl.BlockSpec((tS, hd), lambda b, s_: (s_, 0)),
            pl.BlockSpec((1, hd), lambda b, s_: (0, 0)),
            pl.BlockSpec((1, hd), lambda b, s_: (0, 0)),
        ],
        out_specs=(
            pl.BlockSpec((1, H, tS, hd), lambda b, s_: (b, 0, s_, 0)),
            pl.BlockSpec((1, Hkv, tS, hd), lambda b, s_: (b, 0, s_, 0)),
            pl.BlockSpec((1, Hkv, tS, hd), lambda b, s_: (b, 0, s_, 0)),
        ),
        compiler_params=_cp(("parallel", "parallel")),
    )(x, scale_msa, p["attn_norm1_w"], p["wqkv_t"], cos2, sin2,
      p["q_norm_w"], p["k_norm_w"])

    # ---- 2) flash attention; GQA handled by the k/v index_map (no jnp.repeat)
    attn = pl.pallas_call(
        flash_attn_kernel,
        grid=(B, H, nQ, nK),
        out_shape=jax.ShapeDtypeStruct((B, H, S, hd), bf),
        in_specs=[
            pl.BlockSpec((1, 1, tq, hd), lambda b, h, qi, ki: (b, h, qi, 0)),
            pl.BlockSpec((1, 1, tkv, hd), lambda b, h, qi, ki: (b, h // n_rep, ki, 0)),
            pl.BlockSpec((1, 1, tkv, hd), lambda b, h, qi, ki: (b, h // n_rep, ki, 0)),
            pl.BlockSpec((1, 1, tkv), lambda b, h, qi, ki: (b, 0, ki)),
        ],
        out_specs=pl.BlockSpec((1, 1, tq, hd), lambda b, h, qi, ki: (b, h, qi, 0)),
        scratch_shapes=[pltpu.VMEM((tq, 1), jnp.float32),
                        pltpu.VMEM((tq, 1), jnp.float32),
                        pltpu.VMEM((tq, hd), jnp.float32)],
        compiler_params=_cp(("parallel", "parallel", "parallel", "arbitrary")),
    )(q, k, v, bias)

    # ---- 3) per-head out-projection (no transpose) + RMSNorm2 + gated residual
    x = pl.pallas_call(
        functools.partial(postattn_kernel, eps, H),
        grid=(B, nS),
        out_shape=jax.ShapeDtypeStruct((B, S, D), jnp.float32),
        in_specs=[
            pl.BlockSpec((1, tS, D), lambda b, s_: (b, s_, 0)),
            pl.BlockSpec((1, H, tS, hd), lambda b, s_: (b, 0, s_, 0)),
            pl.BlockSpec((H, hd, D), lambda b, s_: (0, 0, 0)),
            pl.BlockSpec((1, D), lambda b, s_: (0, 0)),
            pl.BlockSpec((1, 1, D), lambda b, s_: (b, 0, 0)),
        ],
        out_specs=pl.BlockSpec((1, tS, D), lambda b, s_: (b, s_, 0)),
        compiler_params=_cp(("parallel", "parallel")),
    )(x, attn, p["wo_h"], p["attn_norm2_w"], gate_msa)

    # ---- 4) FFN: hidden-dim tiled SwiGLU, f32 accumulator, gated residual
    x = pl.pallas_call(
        functools.partial(ffn_kernel, eps),
        grid=(B, nS, nH),
        out_shape=jax.ShapeDtypeStruct((B, S, D), jnp.float32),
        in_specs=[
            pl.BlockSpec((1, tS, D), lambda b, s_, hi: (b, s_, 0)),
            pl.BlockSpec((1, 1, D), lambda b, s_, hi: (b, 0, 0)),
            pl.BlockSpec((1, 1, D), lambda b, s_, hi: (b, 0, 0)),
            pl.BlockSpec((1, D), lambda b, s_, hi: (0, 0)),
            pl.BlockSpec((1, D), lambda b, s_, hi: (0, 0)),
            pl.BlockSpec((D, th), lambda b, s_, hi: (0, hi)),
            pl.BlockSpec((D, th), lambda b, s_, hi: (0, hi)),
            pl.BlockSpec((th, D), lambda b, s_, hi: (hi, 0)),
        ],
        out_specs=pl.BlockSpec((1, tS, D), lambda b, s_, hi: (b, s_, 0)),
        scratch_shapes=[pltpu.VMEM((tS, D), jnp.bfloat16),
                        pltpu.VMEM((tS, D), jnp.float32)],
        compiler_params=_cp(("parallel", "parallel", "arbitrary")),
    )(x, scale_mlp, gate_mlp, p["ffn_norm1_w"], p["ffn_norm2_w"],
      p["w1_t"], p["w3_t"], p["w2_t"])

    return x


# --------------------------- pure-JAX reference -----------------------------

def reference(x, x_mask, cos, sin, adaln_input, p, cfg):
    B, S, D = x.shape
    H, Hkv, hd = cfg["n_heads"], cfg["n_kv_heads"], cfg["head_dim"]
    eps = cfg["eps"]

    def rms(t, w):
        return t * lax.rsqrt(jnp.mean(t * t, -1, keepdims=True) + eps) * w

    a = adaln_input
    ada = (a * jax.nn.sigmoid(a)) @ p["ada_w_t"] + p["ada_b"]
    s_msa, g_msa, s_mlp, g_mlp = jnp.split(ada, 4, axis=-1)

    h = rms(x, p["attn_norm1_w"]) * (1.0 + s_msa[:, None, :])
    qkv = h @ p["wqkv_t"]
    q = qkv[..., : H * hd].reshape(B, S, H, hd)
    k = qkv[..., H * hd:(H + Hkv) * hd].reshape(B, S, Hkv, hd)
    v = qkv[..., (H + Hkv) * hd:].reshape(B, S, Hkv, hd)
    if cfg["qk_norm"]:
        q = rms(q, p["q_norm_w"])
        k = rms(k, p["k_norm_w"])

    def rope_interleaved(t):
        tr = t[..., 0::2]
        ti = t[..., 1::2]
        c = cos[None, :, None, :]
        s_ = sin[None, :, None, :]
        return jnp.stack([tr * c - ti * s_, tr * s_ + ti * c], axis=-1).reshape(t.shape)

    q = rope_interleaved(q)
    k = rope_interleaved(k)
    n_rep = H // Hkv
    if n_rep > 1:
        k = jnp.repeat(k, n_rep, axis=2)
        v = jnp.repeat(v, n_rep, axis=2)

    qh = jnp.transpose(q, (0, 2, 1, 3))
    kh = jnp.transpose(k, (0, 2, 1, 3))
    vh = jnp.transpose(v, (0, 2, 1, 3))
    sc = jnp.einsum("bhqd,bhkd->bhqk", qh, kh) / math.sqrt(hd)
    sc = jnp.where(x_mask[:, None, None, :] > 0.5, sc, -1e30)
    sc = sc - sc.max(-1, keepdims=True)
    pp = jnp.exp(sc)
    pp = pp / pp.sum(-1, keepdims=True)
    out = jnp.einsum("bhqk,bhkd->bhqd", pp, vh)
    out = jnp.transpose(out, (0, 2, 1, 3)).reshape(B, S, H * hd) @ p["wo_t"]
    x = x + jnp.tanh(g_msa)[:, None, :] * rms(out, p["attn_norm2_w"])

    h = rms(x, p["ffn_norm1_w"]) * (1.0 + s_mlp[:, None, :])
    f = (jax.nn.silu(h @ p["w1_t"]) * (h @ p["w3_t"])) @ p["w2_t"]
    x = x + jnp.tanh(g_mlp)[:, None, :] * rms(f, p["ffn_norm2_w"])
    return x


# --------------------------------- main --------------------------------------

if __name__ == "__main__":
    # Small but tiling-exercising config: head_dim = 128 (lane-aligned),
    # GQA (n_rep = 2), 2 S-tiles, 2x2 flash q/kv tiles, 2 FFN hidden tiles.
    B, S = 2, 256
    dim = 256
    n_heads, n_kv_heads = 2, 1
    head_dim = dim // n_heads            # 128
    multiple_of = 256
    ffn_dim_multiplier = 1.0
    norm_eps = 1e-5
    qk_norm = True

    # LlamaFeedForward hidden dim (Llama/Lumina recipe).
    # TODO(synk): hidden_dim_type='lumina' source not provided; using the Llama 2/3 recipe.
    hidden_dim = int(2 * (4 * dim) / 3)
    if ffn_dim_multiplier is not None:
        hidden_dim = int(ffn_dim_multiplier * hidden_dim)
    hidden_dim = multiple_of * ((hidden_dim + multiple_of - 1) // multiple_of)   # 768

    dmin = min(dim, 1024)
    qkv_out = (n_heads + 2 * n_kv_heads) * head_dim

    cfg = dict(n_heads=n_heads, n_kv_heads=n_kv_heads, head_dim=head_dim,
               eps=norm_eps, qk_norm=qk_norm,
               ts=128, tq=128, tkv=128, th=384)

    key = jax.random.PRNGKey(0)
    ks = jax.random.split(key, 16)

    def init(k, shape, scale=0.02):
        return scale * jax.random.normal(k, shape, dtype=jnp.float32)

    def norm_init(k, shape):
        return 1.0 + 0.1 * jax.random.normal(k, shape, dtype=jnp.float32)

    params = {
        "wqkv_t": init(ks[0], (dim, qkv_out)),
        "wo_t": init(ks[1], (n_heads * head_dim, dim)),
        "q_norm_w": norm_init(ks[9], (head_dim,)),
        "k_norm_w": norm_init(ks[10], (head_dim,)),
        "attn_norm1_w": norm_init(ks[11], (dim,)),
        "attn_norm2_w": norm_init(ks[12], (dim,)),
        "ffn_norm1_w": norm_init(ks[13], (dim,)),
        "ffn_norm2_w": norm_init(ks[14], (dim,)),
        "w1_t": init(ks[2], (dim, hidden_dim)),
        "w3_t": init(ks[3], (dim, hidden_dim)),
        "w2_t": init(ks[4], (hidden_dim, dim)),
        "ada_w_t": init(ks[5], (dmin, 4 * dim)),
        "ada_b": init(ks[6], (4 * dim,), scale=0.1),
    }

    x = jax.random.normal(ks[7], (B, S, dim), dtype=jnp.float32)
    adaln_input = jax.random.normal(ks[8], (B, dmin), dtype=jnp.float32)
    # mask out the tail keys of batch 1 (crosses a kv tile boundary).
    x_mask = jnp.ones((B, S), dtype=jnp.float32).at[1, 96:].set(0.0)

    # freqs_cis represented as real cos/sin tables of shape (S, head_dim//2)
    half = head_dim // 2
    inv_freq = 1.0 / (10000.0 ** (jnp.arange(half, dtype=jnp.float32) / half))
    angles = jnp.arange(S, dtype=jnp.float32)[:, None] * inv_freq[None, :]
    cos = jnp.cos(angles)
    sin = jnp.sin(angles)

    prepped = prepare_params(params, cfg)
    out = joint_transformer_block(x, x_mask, cos, sin, adaln_input, prepped, cfg)
    out = jax.block_until_ready(out)

    ref = reference(x, x_mask, cos, sin, adaln_input, params, cfg)
    assert out.shape == (B, S, dim)
    assert bool(jnp.all(jnp.isfinite(out)))
    max_err = float(jnp.max(jnp.abs(out - ref)))
    assert bool(jnp.allclose(out, ref, rtol=2e-2, atol=2e-2)), \
        f"mismatch vs reference (max abs err {max_err})"

    print("KERNEL_OK")
</pallas_src>

<mosaic_0001>
module attributes {stable_mosaic.version = 11 : i64} {
  func.func @preattn_kernel(%arg0: i32, %arg1: i32, %arg2: memref<1x128x256xf32, #tpu.memory_space<vmem>>, %arg3: memref<1x1x256xf32, #tpu.memory_space<vmem>>, %arg4: memref<1x256xf32, #tpu.memory_space<vmem>>, %arg5: memref<256x512xbf16, #tpu.memory_space<vmem>>, %arg6: memref<128x128xf32, #tpu.memory_space<vmem>>, %arg7: memref<128x128xf32, #tpu.memory_space<vmem>>, %arg8: memref<1x128xf32, #tpu.memory_space<vmem>>, %arg9: memref<1x128xf32, #tpu.memory_space<vmem>>, %arg10: memref<1x2x128x128xbf16, #tpu.memory_space<vmem>>, %arg11: memref<1x1x128x128xbf16, #tpu.memory_space<vmem>>, %arg12: memref<1x1x128x128xbf16, #tpu.memory_space<vmem>>) attributes {dimension_semantics = [#tpu.dimension_semantics<parallel>, #tpu.dimension_semantics<parallel>], iteration_bounds = array<i64: 2, 2>, scalar_prefetch = 0 : i64, scratch_operands = 0 : i64, tpu.core_type = #tpu.core_type<tc>, window_params = [{transform_indices = @transform_0, window_bounds = array<i64: 1, 128, 256>}, {transform_indices = @transform_1, window_bounds = array<i64: 1, 1, 256>}, {pipeline_mode = #tpu.pipeline_mode<synchronous>, transform_indices = @transform_2, window_bounds = array<i64: 1, 256>}, {pipeline_mode = #tpu.pipeline_mode<synchronous>, transform_indices = @transform_3, window_bounds = array<i64: 256, 512>}, {transform_indices = @transform_4, window_bounds = array<i64: 128, 128>}, {transform_indices = @transform_5, window_bounds = array<i64: 128, 128>}, {pipeline_mode = #tpu.pipeline_mode<synchronous>, transform_indices = @transform_6, window_bounds = array<i64: 1, 128>}, {pipeline_mode = #tpu.pipeline_mode<synchronous>, transform_indices = @transform_7, window_bounds = array<i64: 1, 128>}, {transform_indices = @transform_8, window_bounds = array<i64: 1, 2, 128, 128>}, {transform_indices = @transform_9, window_bounds = array<i64: 1, 1, 128, 128>}, {transform_indices = @transform_10, window_bounds = array<i64: 1, 1, 128, 128>}]} {
    %c0 = arith.constant 0 : index
    %c0_0 = arith.constant 0 : index
    %c0_1 = arith.constant 0 : index
    %0 = vector.load %arg2[%c0, %c0_0, %c0_1] : memref<1x128x256xf32, #tpu.memory_space<vmem>>, vector<1x128x256xf32>
    %1 = vector.shape_cast %0 : vector<1x128x256xf32> to vector<128x256xf32>
    %c0_2 = arith.constant 0 : index
    %c0_3 = arith.constant 0 : index
    %2 = vector.load %arg4[%c0_2, %c0_3] : memref<1x256xf32, #tpu.memory_space<vmem>>, vector<1x256xf32>
    %3 = arith.mulf %1, %1 : vector<128x256xf32>
    %cst = arith.constant dense<0.000000e+00> : vector<128xf32>
    %4 = vector.multi_reduction <add>, %3, %cst [1] : vector<128x256xf32> to vector<128xf32>
    %5 = vector.shape_cast %4 : vector<128xf32> to vector<128x1xf32>
    %cst_4 = arith.constant 2.560000e+02 : f32
    %6 = vector.broadcast %cst_4 : f32 to vector<128x1xf32>
    %7 = arith.divf %5, %6 : vector<128x1xf32>
    %cst_5 = arith.constant 9.99999974E-6 : f32
    %8 = vector.broadcast %cst_5 : f32 to vector<128x1xf32>
    %9 = arith.addf %7, %8 : vector<128x1xf32>
    %10 = math.rsqrt %9 : vector<128x1xf32>
    %11 = vector.broadcast %10 : vector<128x1xf32> to vector<128x256xf32>
    %12 = arith.mulf %1, %11 : vector<128x256xf32>
    %13 = vector.broadcast %2 : vector<1x256xf32> to vector<128x256xf32>
    %14 = arith.mulf %12, %13 : vector<128x256xf32>
    %c0_6 = arith.constant 0 : index
    %c0_7 = arith.constant 0 : index
    %c0_8 = arith.constant 0 : index
    %15 = vector.load %arg3[%c0_6, %c0_7, %c0_8] : memref<1x1x256xf32, #tpu.memory_space<vmem>>, vector<1x1x256xf32>
    %16 = vector.shape_cast %15 : vector<1x1x256xf32> to vector<1x256xf32>
    %cst_9 = arith.constant 1.000000e+00 : f32
    %17 = vector.broadcast %cst_9 : f32 to vector<1x256xf32>
    %18 = arith.addf %17, %16 : vector<1x256xf32>
    %19 = vector.broadcast %18 : vector<1x256xf32> to vector<128x256xf32>
    %20 = arith.mulf %14, %19 : vector<128x256xf32>
    %21 = arith.truncf %20 : vector<128x256xf32> to vector<128x256xbf16>
    %c0_10 = arith.constant 0 : index
    %c0_11 = arith.constant 0 : index
    %22 = vector.load %arg5[%c0_10, %c0_11] : memref<256x512xbf16, #tpu.memory_space<vmem>>, vector<256x512xbf16>
    %cst_12 = arith.constant dense<0.000000e+00> : vector<128x512xf32>
    %23 = tpu.matmul %21, %22, %cst_12 {dimension_numbers = #tpu.dot_dimension_numbers<[1], [0], [0], [1], [0, 0, 1, 1], [], []>} : vector<128x256xbf16>, vector<256x512xbf16>, vector<128x512xf32> -> vector<128x512xf32>
    %c0_13 = arith.constant 0 : index
    %c0_14 = arith.constant 0 : index
    %24 = vector.load %arg6[%c0_13, %c0_14] : memref<128x128xf32, #tpu.memory_space<vmem>>, vector<128x128xf32>
    %c0_15 = arith.constant 0 : index
    %c0_16 = arith.constant 0 : index
    %25 = vector.load %arg7[%c0_15, %c0_16] : memref<128x128xf32, #tpu.memory_space<vmem>>, vector<128x128xf32>
    %cst_17 = arith.constant 0.0883883461 : f32
    %26 = vector.broadcast %cst_17 : f32 to vector<128x128xf32>
    %27 = arith.mulf %24, %26 : vector<128x128xf32>
    %cst_18 = arith.constant 0.0883883461 : f32
    %28 = vector.broadcast %cst_18 : f32 to vector<128x128xf32>
    %29 = arith.mulf %25, %28 : vector<128x128xf32>
    %30 = vector.extract_strided_slice %23 {offsets = [0, 0], sizes = [128, 128], strides = [1, 1]} : vector<128x512xf32> to vector<128x128xf32>
    %c0_19 = arith.constant 0 : index
    %c0_20 = arith.constant 0 : index
    %31 = vector.load %arg8[%c0_19, %c0_20] : memref<1x128xf32, #tpu.memory_space<vmem>>, vector<1x128xf32>
    %32 = arith.mulf %30, %30 : vector<128x128xf32>
    %cst_21 = arith.constant dense<0.000000e+00> : vector<128xf32>
    %33 = vector.multi_reduction <add>, %32, %cst_21 [1] : vector<128x128xf32> to vector<128xf32>
    %34 = vector.shape_cast %33 : vector<128xf32> to vector<128x1xf32>
    %cst_22 = arith.constant 1.280000e+02 : f32
    %35 = vector.broadcast %cst_22 : f32 to vector<128x1xf32>
    %36 = arith.divf %34, %35 : vector<128x1xf32>
    %cst_23 = arith.constant 9.99999974E-6 : f32
    %37 = vector.broadcast %cst_23 : f32 to vector<128x1xf32>
    %38 = arith.addf %36, %37 : vector<128x1xf32>
    %39 = math.rsqrt %38 : vector<128x1xf32>
    %40 = vector.broadcast %39 : vector<128x1xf32> to vector<128x128xf32>
    %41 = arith.mulf %30, %40 : vector<128x128xf32>
    %42 = vector.broadcast %31 : vector<1x128xf32> to vector<128x128xf32>
    %43 = arith.mulf %41, %42 : vector<128x128xf32>
    %44 = arith.mulf %43, %27 : vector<128x128xf32>
    %c64_i32 = arith.constant 64 : i32
    %45 = tpu.dynamic_rotate %43 by %c64_i32 dim 1 : vector<128x128xf32>, i32 -> vector<128x128xf32>
    %46 = arith.mulf %45, %29 : vector<128x128xf32>
    %47 = arith.addf %44, %46 : vector<128x128xf32>
    %48 = arith.truncf %47 : vector<128x128xf32> to vector<128x128xbf16>
    %c0_24 = arith.constant 0 : index
    %c0_25 = arith.constant 0 : index
    %c0_26 = arith.constant 0 : index
    %c0_27 = arith.constant 0 : index
    %49 = vector.load %arg10[%c0_24, %c0_25, %c0_26, %c0_27] : memref<1x2x128x128xbf16, #tpu.memory_space<vmem>>, vector<1x1x128x128xbf16>
    %50 = vector.shape_cast %49 : vector<1x1x128x128xbf16> to vector<128x128xbf16>
    %51 = vector.shape_cast %48 : vector<128x128xbf16> to vector<1x1x128x128xbf16>
    tpu.vector_store %arg10[%c0_24, %c0_25, %c0_26, %c0_27], %51 {strides = array<i32>} : memref<1x2x128x128xbf16, #tpu.memory_space<vmem>>, vector<1x1x128x128xbf16>,
    %52 = vector.extract_strided_slice %23 {offsets = [0, 128], sizes = [128, 128], strides = [1, 1]} : vector<128x512xf32> to vector<128x128xf32>
    %c0_28 = arith.constant 0 : index
    %c0_29 = arith.constant 0 : index
    %53 = vector.load %arg8[%c0_28, %c0_29] : memref<1x128xf32, #tpu.memory_space<vmem>>, vector<1x128xf32>
    %54 = arith.mulf %52, %52 : vector<128x128xf32>
    %cst_30 = arith.constant dense<0.000000e+00> : vector<128xf32>
    %55 = vector.multi_reduction <add>, %54, %cst_30 [1] : vector<128x128xf32> to vector<128xf32>
    %56 = vector.shape_cast %55 : vector<128xf32> to vector<128x1xf32>
    %cst_31 = arith.constant 1.280000e+02 : f32
    %57 = vector.broadcast %cst_31 : f32 to vector<128x1xf32>
    %58 = arith.divf %56, %57 : vector<128x1xf32>
    %cst_32 = arith.constant 9.99999974E-6 : f32
    %59 = vector.broadcast %cst_32 : f32 to vector<128x1xf32>
    %60 = arith.addf %58, %59 : vector<128x1xf32>
    %61 = math.rsqrt %60 : vector<128x1xf32>
    %62 = vector.broadcast %61 : vector<128x1xf32> to vector<128x128xf32>
    %63 = arith.mulf %52, %62 : vector<128x128xf32>
    %64 = vector.broadcast %53 : vector<1x128xf32> to vector<128x128xf32>
    %65 = arith.mulf %63, %64 : vector<128x128xf32>
    %66 = arith.mulf %65, %27 : vector<128x128xf32>
    %c64_i32_33 = arith.constant 64 : i32
    %67 = tpu.dynamic_rotate %65 by %c64_i32_33 dim 1 : vector<128x128xf32>, i32 -> vector<128x128xf32>
    %68 = arith.mulf %67, %29 : vector<128x128xf32>
    %69 = arith.addf %66, %68 : vector<128x128xf32>
    %70 = arith.truncf %69 : vector<128x128xf32> to vector<128x128xbf16>
    %c0_34 = arith.constant 0 : index
    %c1 = arith.constant 1 : index
    %c0_35 = arith.constant 0 : index
    %c0_36 = arith.constant 0 : index
    %71 = vector.load %arg10[%c0_34, %c1, %c0_35, %c0_36] : memref<1x2x128x128xbf16, #tpu.memory_space<vmem>>, vector<1x1x128x128xbf16>
    %72 = vector.shape_cast %71 : vector<1x1x128x128xbf16> to vector<128x128xbf16>
    %73 = vector.shape_cast %70 : vector<128x128xbf16> to vector<1x1x128x128xbf16>
    tpu.vector_store %arg10[%c0_34, %c1, %c0_35, %c0_36], %73 {strides = array<i32>} : memref<1x2x128x128xbf16, #tpu.memory_space<vmem>>, vector<1x1x128x128xbf16>,
    %74 = vector.extract_strided_slice %23 {offsets = [0, 256], sizes = [128, 128], strides = [1, 1]} : vector<128x512xf32> to vector<128x128xf32>
    %c0_37 = arith.constant 0 : index
    %c0_38 = arith.constant 0 : index
    %75 = vector.load %arg9[%c0_37, %c0_38] : memref<1x128xf32, #tpu.memory_space<vmem>>, vector<1x128xf32>
    %76 = arith.mulf %74, %74 : vector<128x128xf32>
    %cst_39 = arith.constant dense<0.000000e+00> : vector<128xf32>
    %77 = vector.multi_reduction <add>, %76, %cst_39 [1] : vector<128x128xf32> to vector<128xf32>
    %78 = vector.shape_cast %77 : vector<128xf32> to vector<128x1xf32>
    %cst_40 = arith.constant 1.280000e+02 : f32
    %79 = vector.broadcast %cst_40 : f32 to vector<128x1xf32>
    %80 = arith.divf %78, %79 : vector<128x1xf32>
    %cst_41 = arith.constant 9.99999974E-6 : f32
    %81 = vector.broadcast %cst_41 : f32 to vector<128x1xf32>
    %82 = arith.addf %80, %81 : vector<128x1xf32>
    %83 = math.rsqrt %82 : vector<128x1xf32>
    %84 = vector.broadcast %83 : vector<128x1xf32> to vector<128x128xf32>
    %85 = arith.mulf %74, %84 : vector<128x128xf32>
    %86 = vector.broadcast %75 : vector<1x128xf32> to vector<128x128xf32>
    %87 = arith.mulf %85, %86 : vector<128x128xf32>
    %88 = arith.mulf %87, %24 : vector<128x128xf32>
    %c64_i32_42 = arith.constant 64 : i32
    %89 = tpu.dynamic_rotate %87 by %c64_i32_42 dim 1 : vector<128x128xf32>, i32 -> vector<128x128xf32>
    %90 = arith.mulf %89, %25 : vector<128x128xf32>
    %91 = arith.addf %88, %90 : vector<128x128xf32>
    %92 = arith.truncf %91 : vector<128x128xf32> to vector<128x128xbf16>
    %c0_43 = arith.constant 0 : index
    %c0_44 = arith.constant 0 : index
    %c0_45 = arith.constant 0 : index
    %c0_46 = arith.constant 0 : index
    %93 = vector.load %arg11[%c0_43, %c0_44, %c0_45, %c0_46] : memref<1x1x128x128xbf16, #tpu.memory_space<vmem>>, vector<1x1x128x128xbf16>
    %94 = vector.shape_cast %93 : vector<1x1x128x128xbf16> to vector<128x128xbf16>
    %95 = vector.shape_cast %92 : vector<128x128xbf16> to vector<1x1x128x128xbf16>
    tpu.vector_store %arg11[%c0_43, %c0_44, %c0_45, %c0_46], %95 {strides = array<i32>} : memref<1x1x128x128xbf16, #tpu.memory_space<vmem>>, vector<1x1x128x128xbf16>,
    %96 = vector.extract_strided_slice %23 {offsets = [0, 384], sizes = [128, 128], strides = [1, 1]} : vector<128x512xf32> to vector<128x128xf32>
    %97 = arith.truncf %96 : vector<128x128xf32> to vector<128x128xbf16>
    %c0_47 = arith.constant 0 : index
    %c0_48 = arith.constant 0 : index
    %c0_49 = arith.constant 0 : index
    %c0_50 = arith.constant 0 : index
    %98 = vector.load %arg12[%c0_47, %c0_48, %c0_49, %c0_50] : memref<1x1x128x128xbf16, #tpu.memory_space<vmem>>, vector<1x1x128x128xbf16>
    %99 = vector.shape_cast %98 : vector<1x1x128x128xbf16> to vector<128x128xbf16>
    %100 = vector.shape_cast %97 : vector<128x128xbf16> to vector<1x1x128x128xbf16>
    tpu.vector_store %arg12[%c0_47, %c0_48, %c0_49, %c0_50], %100 {strides = array<i32>} : memref<1x1x128x128xbf16, #tpu.memory_space<vmem>>, vector<1x1x128x128xbf16>,
    return
  }
  func.func @transform_0(%arg0: i32, %arg1: i32) -> (i32, i32, i32) {
    %c0_i32 = arith.constant 0 : i32
    %c0_i32_0 = arith.constant 0 : i32
    return %arg0, %arg1, %c0_i32 : i32, i32, i32
  }
  func.func @transform_1(%arg0: i32, %arg1: i32) -> (i32, i32, i32) {
    %c0_i32 = arith.constant 0 : i32
    %c0_i32_0 = arith.constant 0 : i32
    %c0_i32_1 = arith.constant 0 : i32
    return %arg0, %c0_i32, %c0_i32_0 : i32, i32, i32
  }
  func.func @transform_2(%arg0: i32, %arg1: i32) -> (i32, i32) {
    %c0_i32 = arith.constant 0 : i32
    %c0_i32_0 = arith.constant 0 : i32
    %c0_i32_1 = arith.constant 0 : i32
    return %c0_i32, %c0_i32_0 : i32, i32
  }
  func.func @transform_3(%arg0: i32, %arg1: i32) -> (i32, i32) {
    %c0_i32 = arith.constant 0 : i32
    %c0_i32_0 = arith.constant 0 : i32
    %c0_i32_1 = arith.constant 0 : i32
    return %c0_i32, %c0_i32_0 : i32, i32
  }
  func.func @transform_4(%arg0: i32, %arg1: i32) -> (i32, i32) {
    %c0_i32 = arith.constant 0 : i32
    %c0_i32_0 = arith.constant 0 : i32
    return %arg1, %c0_i32 : i32, i32
  }
  func.func @transform_5(%arg0: i32, %arg1: i32) -> (i32, i32) {
    %c0_i32 = arith.constant 0 : i32
    %c0_i32_0 = arith.constant 0 : i32
    return %arg1, %c0_i32 : i32, i32
  }
  func.func @transform_6(%arg0: i32, %arg1: i32) -> (i32, i32) {
    %c0_i32 = arith.constant 0 : i32
    %c0_i32_0 = arith.constant 0 : i32
    %c0_i32_1 = arith.constant 0 : i32
    return %c0_i32, %c0_i32_0 : i32, i32
  }
  func.func @transform_7(%arg0: i32, %arg1: i32) -> (i32, i32) {
    %c0_i32 = arith.constant 0 : i32
    %c0_i32_0 = arith.constant 0 : i32
    %c0_i32_1 = arith.constant 0 : i32
    return %c0_i32, %c0_i32_0 : i32, i32
  }
  func.func @transform_8(%arg0: i32, %arg1: i32) -> (i32, i32, i32, i32) {
    %c0_i32 = arith.constant 0 : i32
    %c0_i32_0 = arith.constant 0 : i32
    %c0_i32_1 = arith.constant 0 : i32
    return %arg0, %c0_i32, %arg1, %c0_i32_0 : i32, i32, i32, i32
  }
  func.func @transform_9(%arg0: i32, %arg1: i32) -> (i32, i32, i32, i32) {
    %c0_i32 = arith.constant 0 : i32
    %c0_i32_0 = arith.constant 0 : i32
    %c0_i32_1 = arith.constant 0 : i32
    return %arg0, %c0_i32, %arg1, %c0_i32_0 : i32, i32, i32, i32
  }
  func.func @transform_10(%arg0: i32, %arg1: i32) -> (i32, i32, i32, i32) {
    %c0_i32 = arith.constant 0 : i32
    %c0_i32_0 = arith.constant 0 : i32
    %c0_i32_1 = arith.constant 0 : i32
    return %arg0, %c0_i32, %arg1, %c0_i32_0 : i32, i32, i32, i32
  }
}

</mosaic_0001>

<llo_original>
// kernel: tpu_custom_call.1
$region0: #{tpu_custom_call.1}
  #allocation0 [shape = 'u32[]', space=smem, size = 0x4, offset = 0x4, fixed_abs, tag = 'smem constant byte address 0x4 - core index']
  #allocation1 [shape = 'u32[144,128]{1,0:T(1,128)}', space=vmem, size = 0x12000, scoped, tag = 'internal scratch']
  #allocation15 [shape = 's32[]', space=sflag, size = 0x4, offset = 0, fixed_abs, tag = 'sflag constant byte address 0x0 - dummy sync flag']
  %s0 = inlined_call_operand.hbm [shape: f32[2,256,256], index: 0, kind: input, shape index: {}]
  %s1 = inlined_call_operand.hbm [shape: f32[2,1,256], index: 1, kind: input, shape index: {}]
  %s2 = inlined_call_operand.vmem [shape: f32[1,256], index: 2, kind: input, shape index: {}]
  %s3 = inlined_call_operand.hbm [shape: bf16[256,512], index: 3, kind: input, shape index: {}]
  %s4 = inlined_call_operand.hbm [shape: f32[256,128], index: 4, kind: input, shape index: {}]
  %s5 = inlined_call_operand.hbm [shape: f32[256,128], index: 5, kind: input, shape index: {}]
  %s6 = inlined_call_operand.vmem [shape: f32[1,128], index: 6, kind: input, shape index: {}]
  %s7 = inlined_call_operand.vmem [shape: f32[1,128], index: 7, kind: input, shape index: {}]
  %s8 = inlined_call_operand.hbm [shape: bf16[2,2,256,128], index: 8, kind: output, shape index: {0}]
  %s9 = inlined_call_operand.hbm [shape: bf16[2,1,256,128], index: 9, kind: output, shape index: {1}]
  %s10 = inlined_call_operand.hbm [shape: bf16[2,1,256,128], index: 10, kind: output, shape index: {2}]
  %11 = xla_tuple %s8, %s9, %s10
  %s12 = sld [smem:[#allocation0]]
  $region101: #{tpu_custom_call.1} parent=0
    _
  %s14 = ssub.s32 1, %s12
  %s15 = scalar_select 0, %s14, %s12
  $region1: #{tpu_custom_call.1} parent=0
    #allocation2 [shape = 'u8[262144]{0}', space=vmem, size = 0x40000, scoped, tag = 'input window, operand 0']
    #allocation3 [shape = 's32[2]{0}', space=sflag, size = 0x8, scoped, tag = 'scoped memory for tpu_custom_call.1']
    #allocation4 [shape = 's32[2]{0}', space=sflag, size = 0x8, scoped, tag = 'scoped memory for tpu_custom_call.1']
    #allocation5 [shape = 'u8[2048]{0}', space=vmem, size = 0x800, scoped, tag = 'input window, operand 1']
    #allocation6 [shape = 's32[2]{0}', space=sflag, size = 0x8, scoped, tag = 'scoped memory for tpu_custom_call.1']
    #allocation7 [shape = 'u8[262144]{0}', space=vmem, size = 0x40000, scoped, tag = 'input window, operand 3, single buffered']
    #allocation8 [shape = 'u8[131072]{0}', space=vmem, size = 0x20000, scoped, tag = 'input window, operand 4']
    #allocation9 [shape = 's32[2]{0}', space=sflag, size = 0x8, scoped, tag = 'scoped memory for tpu_custom_call.1']
    #allocation10 [shape = 'u8[131072]{0}', space=vmem, size = 0x20000, scoped, tag = 'input window, operand 5']
    #allocation11 [shape = 'u8[131072]{0}', space=vmem, size = 0x20000, scoped, tag = 'output window, operand 0']
    #allocation12 [shape = 'u8[65536]{0}', space=vmem, size = 0x10000, scoped, tag = 'output window, operand 1']
    #allocation13 [shape = 's32[2]{0}', space=sflag, size = 0x8, scoped, tag = 'scoped memory for tpu_custom_call.1']
    #allocation14 [shape = 'u8[65536]{0}', space=vmem, size = 0x10000, scoped, tag = 'output window, operand 2']
    %16 = vsyncpa [#allocation3], 0
    %s17 = scalar_lea.sflag [#allocation3], 1
    %18 = vsyncpa %s17, 0
    %19 = vsyncpa [#allocation6], 0
    %s20 = scalar_lea.sflag [#allocation6], 1
    %21 = vsyncpa %s20, 0
    %22 = vsyncpa [#allocation9], 0
    %s23 = scalar_lea.sflag [#allocation9], 1
    %24 = vsyncpa %s23, 0
    %25 = vsyncpa [#allocation4], 0
    %s26 = scalar_lea.sflag [#allocation4], 1
    %27 = vsyncpa %s26, 0
    %28 = vsyncpa [#allocation13], 0
    %s29 = scalar_lea.sflag [#allocation13], 1
    %30 = vsyncpa %s29, 0
    loop: start=0, step=1, limit=6
    $region2: #{tpu_custom_call.1} parent=1 // loop_pre_header
      _
    $region3: #{tpu_custom_call.1} parent=1 // loop_header
      %s32 = sphi 0, %s36
      %p33 = scmp.ge.s32.totalorder %s32, 6
      %s39 = sphi 0, %s51
      %s40 = sphi 0, %s47
      %s41 = sphi 0, %s39
      %s42 = sphi 0, %s40
      %s43 = sphi 0, %s41
      %s44 = sphi 0, %s42
      %s56 = sphi 0, %s58
      %s59 = sphi 0, %s56
      %s60 = sphi 0, %s59
      %s76 = sphi 0, %s60
      %s82 = sphi 0, %s84
      %s85 = sphi 0, %s82
      %s86 = sphi 0, %s85
      %s102 = sphi 0, %s86
      %s106 = sphi 0, %s106
      %s108 = sphi 0, %s106
      %s109 = sphi 0, %s108
      %s123 = sphi 0, %s109
      %s127 = sphi 0, %s127
      %s129 = sphi 0, %s127
      %s130 = sphi 0, %s129
      %s144 = sphi 0, %s130
      %s150 = sphi 0, %s152
      %s153 = sphi 0, %s150
      %s154 = sphi 0, %s153
      %s170 = sphi 0, %s154
      %s176 = sphi 0, %s178
      %s179 = sphi 0, %s176
      %s180 = sphi 0, %s179
      %s196 = sphi 0, %s180
      %s200 = sphi 0, %s200
      %s202 = sphi 0, %s200
      %s203 = sphi 0, %s202
      %s217 = sphi 0, %s203
      %s221 = sphi 0, %s221
      %s223 = sphi 0, %s221
      %s224 = sphi 0, %s223
      %s238 = sphi 0, %s224
      %s246 = sphi 0, %s248
      %s249 = sphi 0, %s246
      %s250 = sphi 0, %s249
      %s266 = sphi 0, %s250
      %s274 = sphi 0, %s276
      %s277 = sphi 0, %s274
      %s278 = sphi 0, %s277
      %s294 = sphi 0, %s278
      %s302 = sphi 0, %s304
      %s305 = sphi 0, %s302
      %s306 = sphi 0, %s305
      %s322 = sphi 0, %s306
    $region4: #{tpu_custom_call.1} parent=1 // loop_header_branch
      %35 = sbr.rel (%p33) target = $region8
    $region5: #{tpu_custom_call.1} parent=1 // loop_body
      %s37 = ssub.s32 %s32, 1
      %s38 = ssub.s32 %s32, 2
      %s45 = sadd.s32 1, %s40
      %p46 = scmp.ge.s32.totalorder %s45, 2
      %s47 = scalar_select %p46, 0, %s45
      %s48 = sadd.s32 1, %s39
      %s49 = scalar_select %p46, %s48, %s39
      %p50 = scmp.ge.s32.totalorder %s49, 2
      %s51 = scalar_select %p50, 0, %s49
      %s52 = ssub.s32 %s39, %s51
      %s53 = ssub.s32 %s40, %s47
      %s54 = sor.u32 %s52, %s53
      %p55 = scmp.eq.s32.totalorder %s54, 0
      %s57 = sadd.s32 %s56, 1
      %s58 = scalar_select %p55, %s56, %s57
      %p61 = pneg %p55
      %p62 = scmp.eq.s32.totalorder %s32, 3
      %p63 = por %p61, %p62
      %p64 = scmp.ne.s32.totalorder %s56, %s59
      %p65 = scmp.eq.s32.totalorder %s32, 0
      %p66 = por %p64, %p65
      %p67 = scmp.ne.s32.totalorder %s56, %s59
      %p68 = scmp.eq.s32.totalorder %s37, 3
      %p69 = por %p67, %p68
      %p70 = scmp.ne.s32.totalorder %s59, %s60
      %p71 = scmp.eq.s32.totalorder %s37, 0
      %p72 = por %p70, %p71
      %p73 = scmp.ne.s32.totalorder %s59, %s60
      %p74 = scmp.eq.s32.totalorder %s38, 3
      %p75 = por %p73, %p74
      %p77 = scmp.ne.s32.totalorder %s60, %s76
      %p78 = scmp.eq.s32.totalorder %s38, 0
      %p79 = por %p77, %p78
      %s80 = ssub.s32 %s39, %s51
      %p81 = scmp.eq.s32.totalorder %s80, 0
      %s83 = sadd.s32 %s82, 1
      %s84 = scalar_select %p81, %s82, %s83
      %p87 = pneg %p81
      %p88 = scmp.eq.s32.totalorder %s32, 3
      %p89 = por %p87, %p88
      %p90 = scmp.ne.s32.totalorder %s82, %s85
      %p91 = scmp.eq.s32.totalorder %s32, 0
      %p92 = por %p90, %p91
      %p93 = scmp.ne.s32.totalorder %s82, %s85
      %p94 = scmp.eq.s32.totalorder %s37, 3
      %p95 = por %p93, %p94
      %p96 = scmp.ne.s32.totalorder %s85, %s86
      %p97 = scmp.eq.s32.totalorder %s37, 0
      %p98 = por %p96, %p97
      %p99 = scmp.ne.s32.totalorder %s85, %s86
      %p100 = scmp.eq.s32.totalorder %s38, 3
      %p101 = por %p99, %p100
      %p103 = scmp.ne.s32.totalorder %s86, %s102
      %p104 = scmp.eq.s32.totalorder %s38, 0
      %p105 = por %p103, %p104
      %s107 = sadd.s32 %s106, 1
      %p110 = scmp.eq.s32.totalorder %s32, 3
      %p111 = scmp.ne.s32.totalorder %s106, %s108
      %p112 = scmp.eq.s32.totalorder %s32, 0
      %p113 = por %p111, %p112
      %p114 = scmp.ne.s32.totalorder %s106, %s108
      %p115 = scmp.eq.s32.totalorder %s37, 3
      %p116 = por %p114, %p115
      %p117 = scmp.ne.s32.totalorder %s108, %s109
      %p118 = scmp.eq.s32.totalorder %s37, 0
      %p119 = por %p117, %p118
      %p120 = scmp.ne.s32.totalorder %s108, %s109
      %p121 = scmp.eq.s32.totalorder %s38, 3
      %p122 = por %p120, %p121
      %p124 = scmp.ne.s32.totalorder %s109, %s123
      %p125 = scmp.eq.s32.totalorder %s38, 0
      %p126 = por %p124, %p125
      %s128 = sadd.s32 %s127, 1
      %p131 = scmp.eq.s32.totalorder %s32, 3
      %p132 = scmp.ne.s32.totalorder %s127, %s129
      %p133 = scmp.eq.s32.totalorder %s32, 0
      %p134 = por %p132, %p133
      %p135 = scmp.ne.s32.totalorder %s127, %s129
      %p136 = scmp.eq.s32.totalorder %s37, 3
      %p137 = por %p135, %p136
      %p138 = scmp.ne.s32.totalorder %s129, %s130
      %p139 = scmp.eq.s32.totalorder %s37, 0
      %p140 = por %p138, %p139
      %p141 = scmp.ne.s32.totalorder %s129, %s130
      %p142 = scmp.eq.s32.totalorder %s38, 3
      %p143 = por %p141, %p142
      %p145 = scmp.ne.s32.totalorder %s130, %s144
      %p146 = scmp.eq.s32.totalorder %s38, 0
      %p147 = por %p145, %p146
      %s148 = ssub.s32 %s40, %s47
      %p149 = scmp.eq.s32.totalorder %s148, 0
      %s151 = sadd.s32 %s150, 1
      %s152 = scalar_select %p149, %s150, %s151
      %p155 = pneg %p149
      %p156 = scmp.eq.s32.totalorder %s32, 3
      %p157 = por %p155, %p156
      %p158 = scmp.ne.s32.totalorder %s150, %s153
      %p159 = scmp.eq.s32.totalorder %s32, 0
      %p160 = por %p158, %p159
      %p161 = scmp.ne.s32.totalorder %s150, %s153
      %p162 = scmp.eq.s32.totalorder %s37, 3
      %p163 = por %p161, %p162
      %p164 = scmp.ne.s32.totalorder %s153, %s154
      %p165 = scmp.eq.s32.totalorder %s37, 0
      %p166 = por %p164, %p165
      %p167 = scmp.ne.s32.totalorder %s153, %s154
      %p168 = scmp.eq.s32.totalorder %s38, 3
      %p169 = por %p167, %p168
      %p171 = scmp.ne.s32.totalorder %s154, %s170
      %p172 = scmp.eq.s32.totalorder %s38, 0
      %p173 = por %p171, %p172
      %s174 = ssub.s32 %s40, %s47
      %p175 = scmp.eq.s32.totalorder %s174, 0
      %s177 = sadd.s32 %s176, 1
      %s178 = scalar_select %p175, %s176, %s177
      %p181 = pneg %p175
      %p182 = scmp.eq.s32.totalorder %s32, 3
      %p183 = por %p181, %p182
      %p184 = scmp.ne.s32.totalorder %s176, %s179
      %p185 = scmp.eq.s32.totalorder %s32, 0
      %p186 = por %p184, %p185
      %p187 = scmp.ne.s32.totalorder %s176, %s179
      %p188 = scmp.eq.s32.totalorder %s37, 3
      %p189 = por %p187, %p188
      %p190 = scmp.ne.s32.totalorder %s179, %s180
      %p191 = scmp.eq.s32.totalorder %s37, 0
      %p192 = por %p190, %p191
      %p193 = scmp.ne.s32.totalorder %s179, %s180
      %p194 = scmp.eq.s32.totalorder %s38, 3
      %p195 = por %p193, %p194
      %p197 = scmp.ne.s32.totalorder %s180, %s196
      %p198 = scmp.eq.s32.totalorder %s38, 0
      %p199 = por %p197, %p198
      %s201 = sadd.s32 %s200, 1
      %p204 = scmp.eq.s32.totalorder %s32, 3
      %p205 = scmp.ne.s32.totalorder %s200, %s202
      %p206 = scmp.eq.s32.totalorder %s32, 0
      %p207 = por %p205, %p206
      %p208 = scmp.ne.s32.totalorder %s200, %s202
      %p209 = scmp.eq.s32.totalorder %s37, 3
      %p210 = por %p208, %p209
      %p211 = scmp.ne.s32.totalorder %s202, %s203
      %p212 = scmp.eq.s32.totalorder %s37, 0
      %p213 = por %p211, %p212
      %p214 = scmp.ne.s32.totalorder %s202, %s203
      %p215 = scmp.eq.s32.totalorder %s38, 3
      %p216 = por %p214, %p215
      %p218 = scmp.ne.s32.totalorder %s203, %s217
      %p219 = scmp.eq.s32.totalorder %s38, 0
      %p220 = por %p218, %p219
      %s222 = sadd.s32 %s221, 1
      %p225 = scmp.eq.s32.totalorder %s32, 3
      %p226 = scmp.ne.s32.totalorder %s221, %s223
      %p227 = scmp.eq.s32.totalorder %s32, 0
      %p228 = por %p226, %p227
      %p229 = scmp.ne.s32.totalorder %s221, %s223
      %p230 = scmp.eq.s32.totalorder %s37, 3
      %p231 = por %p229, %p230
      %p232 = scmp.ne.s32.totalorder %s223, %s224
      %p233 = scmp.eq.s32.totalorder %s37, 0
      %p234 = por %p232, %p233
      %p235 = scmp.ne.s32.totalorder %s223, %s224
      %p236 = scmp.eq.s32.totalorder %s38, 3
      %p237 = por %p235, %p236
      %p239 = scmp.ne.s32.totalorder %s224, %s238
      %p240 = scmp.eq.s32.totalorder %s38, 0
      %p241 = por %p239, %p240
      %s242 = ssub.s32 %s39, %s51
      %s243 = ssub.s32 %s40, %s47
      %s244 = sor.u32 %s242, %s243
      %p245 = scmp.eq.s32.totalorder %s244, 0
      %s247 = sadd.s32 %s246, 1
      %s248 = scalar_select %p245, %s246, %s247
      %p251 = pneg %p245
      %p252 = scmp.eq.s32.totalorder %s32, 3
      %p253 = por %p251, %p252
      %p254 = scmp.ne.s32.totalorder %s246, %s249
      %p255 = scmp.eq.s32.totalorder %s32, 0
      %p256 = por %p254, %p255
      %p257 = scmp.ne.s32.totalorder %s246, %s249
      %p258 = scmp.eq.s32.totalorder %s37, 3
      %p259 = por %p257, %p258
      %p260 = scmp.ne.s32.totalorder %s249, %s250
      %p261 = scmp.eq.s32.totalorder %s37, 0
      %p262 = por %p260, %p261
      %p263 = scmp.ne.s32.totalorder %s249, %s250
      %p264 = scmp.eq.s32.totalorder %s38, 3
      %p265 = por %p263, %p264
      %p267 = scmp.ne.s32.totalorder %s250, %s266
      %p268 = scmp.eq.s32.totalorder %s38, 0
      %p269 = por %p267, %p268
      %s270 = ssub.s32 %s39, %s51
      %s271 = ssub.s32 %s40, %s47
      %s272 = sor.u32 %s270, %s271
      %p273 = scmp.eq.s32.totalorder %s272, 0
      %s275 = sadd.s32 %s274, 1
      %s276 = scalar_select %p273, %s274, %s275
      %p279 = pneg %p273
      %p280 = scmp.eq.s32.totalorder %s32, 3
      %p281 = por %p279, %p280
      %p282 = scmp.ne.s32.totalorder %s274, %s277
      %p283 = scmp.eq.s32.totalorder %s32, 0
      %p284 = por %p282, %p283
      %p285 = scmp.ne.s32.totalorder %s274, %s277
      %p286 = scmp.eq.s32.totalorder %s37, 3
      %p287 = por %p285, %p286
      %p288 = scmp.ne.s32.totalorder %s277, %s278
      %p289 = scmp.eq.s32.totalorder %s37, 0
      %p290 = por %p288, %p289
      %p291 = scmp.ne.s32.totalorder %s277, %s278
      %p292 = scmp.eq.s32.totalorder %s38, 3
      %p293 = por %p291, %p292
      %p295 = scmp.ne.s32.totalorder %s278, %s294
      %p296 = scmp.eq.s32.totalorder %s38, 0
      %p297 = por %p295, %p296
      %s298 = ssub.s32 %s39, %s51
      %s299 = ssub.s32 %s40, %s47
      %s300 = sor.u32 %s298, %s299
      %p301 = scmp.eq.s32.totalorder %s300, 0
      %s303 = sadd.s32 %s302, 1
      %s304 = scalar_select %p301, %s302, %s303
      %p307 = pneg %p301
      %p308 = scmp.eq.s32.totalorder %s32, 3
      %p309 = por %p307, %p308
      %p310 = scmp.ne.s32.totalorder %s302, %s305
      %p311 = scmp.eq.s32.totalorder %s32, 0
      %p312 = por %p310, %p311
      %p313 = scmp.ne.s32.totalorder %s302, %s305
      %p314 = scmp.eq.s32.totalorder %s37, 3
      %p315 = por %p313, %p314
      %p316 = scmp.ne.s32.totalorder %s305, %s306
      %p317 = scmp.eq.s32.totalorder %s37, 0
      %p318 = por %p316, %p317
      %p319 = scmp.ne.s32.totalorder %s305, %s306
      %p320 = scmp.eq.s32.totalorder %s38, 3
      %p321 = por %p319, %p320
      %p323 = scmp.ne.s32.totalorder %s306, %s322
      %p324 = scmp.eq.s32.totalorder %s38, 0
      %p325 = por %p323, %p324
      %p326 = scmp.le.s32.totalorder 1, %s32
      %p327 = scmp.lt.s32.totalorder %s32, 5
      %p328 = pnand %p326, %p327
      %p329 = pneg %p328
      // Predicated region
      $region9: #{tpu_custom_call.1} parent=5 // pred_check
        _
      $region10: #{tpu_custom_call.1} parent=5 // pred_check_branch
        %331 = sbr.rel (%p328) target = $region12
      $region11: #{tpu_custom_call.1} parent=5 // pred_region
        %s332 = ssub.s32 %s32, 1
        // Predicated region
        $region13: #{tpu_custom_call.1} parent=11 // pred_check
          %p333 = pneg %p119
        $region14: #{tpu_custom_call.1} parent=11 // pred_check_branch
          %335 = sbr.rel (%p333) target = $region16
        $region15: #{tpu_custom_call.1} parent=11 // pred_region
          _
        $region16: #{tpu_custom_call.1} parent=11 // pred_fallthru
          _
        // Predicated region
        $region17: #{tpu_custom_call.1} parent=11 // pred_check
          %p336 = pneg %p140
        $region18: #{tpu_custom_call.1} parent=11 // pred_check_branch
          %338 = sbr.rel (%p336) target = $region20
        $region19: #{tpu_custom_call.1} parent=11 // pred_region
          %s340 = ssub.s32 8192, 8192
          %341 = vsyncadd [#allocation6], %s340
          %s342 = sshll.u32 [#allocation7], 4
          %s343 = int_to_ptr.vmem [resolvable:$true] %s342
          %348 = dma.hbm_to_vmem [thread:$0]  %s3, 8192, %s343, [#allocation6], 256, 256, 16
        $region20: #{tpu_custom_call.1} parent=11 // pred_fallthru
          _
        // Predicated region
        $region21: #{tpu_custom_call.1} parent=11 // pred_check
          %p349 = pneg %p213
        $region22: #{tpu_custom_call.1} parent=11 // pred_check_branch
          %351 = sbr.rel (%p349) target = $region24
        $region23: #{tpu_custom_call.1} parent=11 // pred_region
          _
        $region24: #{tpu_custom_call.1} parent=11 // pred_fallthru
          _
        // Predicated region
        $region25: #{tpu_custom_call.1} parent=11 // pred_check
          %p352 = pneg %p234
        $region26: #{tpu_custom_call.1} parent=11 // pred_check_branch
          %354 = sbr.rel (%p352) target = $region28
        $region27: #{tpu_custom_call.1} parent=11 // pred_region
          _
        $region28: #{tpu_custom_call.1} parent=11 // pred_fallthru
          _
      $region12: #{tpu_custom_call.1} parent=5 // pred_fallthru
        _
      %p355 = scmp.lt.s32.totalorder %s32, 4
      // Predicated region
      $region29: #{tpu_custom_call.1} parent=5 // pred_check
        %p356 = pneg %p355
      $region30: #{tpu_custom_call.1} parent=5 // pred_check_branch
        %358 = sbr.rel (%p356) target = $region32
      $region31: #{tpu_custom_call.1} parent=5 // pred_region
        // Predicated region
        $region33: #{tpu_custom_call.1} parent=31 // pred_check
          %p359 = pneg %p66
        $region34: #{tpu_custom_call.1} parent=31 // pred_check_branch
          %361 = sbr.rel (%p359) target = $region36
        $region35: #{tpu_custom_call.1} parent=31 // pred_region
          %s362 = sand.u32 %s56, 1
          %s363 = scalar_lea.sflag [#allocation3], %s362
          %s364 = sand.u32 %s56, 1
          %s365 = smul.addr %s364, 256
          %s366 = scalar_lea.vmem [#allocation2], %s365
          %s367 = smul.u32 16, %s40
          %s369 = ssub.s32 4096, 4096
          %370 = vsyncadd %s363, %s369
          %s371 = smul.addr %s367, 2
          %s372 = smul.addr %s39, 64
          %s373 = sadd.s32 %s371, %s372
          %s374 = smul.addr %s373, 128
          %s375 = scalar_lea.hbm %s0, %s374
          %s376 = sshll.u32 %s366, 4
          %s377 = int_to_ptr.vmem [resolvable:$true] %s376
          %382 = dma.hbm_to_vmem [thread:$0]  %s375, 4096, %s377, %s363, 256, 256, 16
        $region36: #{tpu_custom_call.1} parent=31 // pred_fallthru
          _
        // Predicated region
        $region37: #{tpu_custom_call.1} parent=31 // pred_check
          %p383 = pneg %p92
        $region38: #{tpu_custom_call.1} parent=31 // pred_check_branch
          %385 = sbr.rel (%p383) target = $region40
        $region39: #{tpu_custom_call.1} parent=31 // pred_region
          %s386 = sand.u32 %s32, 1
          %s387 = scalar_lea.sflag [#allocation6], %s386
          %s388 = sand.u32 %s82, 1
          %s389 = smul.addr %s388, 2
          %s390 = scalar_lea.vmem [#allocation5], %s389
          %s392 = ssub.s32 32, 32
          %393 = vsyncadd %s387, %s392
          %s394 = smul.addr %s39, 2
          %s395 = smul.addr %s394, 16
          %s396 = scalar_lea.hbm %s1, %s395
          %s398 = sshll.u32 %s390, 4
          %s399 = int_to_ptr.vmem [resolvable:$true] %s398
          %401 = dma.hbm_to_vmem [thread:$0]  %s396, 32, %s399, %s387
        $region40: #{tpu_custom_call.1} parent=31 // pred_fallthru
          _
        // Predicated region
        $region41: #{tpu_custom_call.1} parent=31 // pred_check
          %p402 = pneg %p160
        $region42: #{tpu_custom_call.1} parent=31 // pred_check_branch
          %404 = sbr.rel (%p402) target = $region44
        $region43: #{tpu_custom_call.1} parent=31 // pred_region
          %s405 = sand.u32 %s32, 1
          %s406 = scalar_lea.sflag [#allocation9], %s405
          %s407 = sand.u32 %s150, 1
          %s408 = smul.addr %s407, 128
          %s409 = scalar_lea.vmem [#allocation8], %s408
          %s410 = smul.u32 16, %s40
          %s412 = ssub.s32 2048, 2048
          %413 = vsyncadd %s406, %s412
          %s414 = smul.addr %s410, 128
          %s415 = scalar_lea.hbm %s4, %s414
          %s416 = sshll.u32 %s409, 4
          %s417 = int_to_ptr.vmem [resolvable:$true] %s416
          %422 = dma.hbm_to_vmem [thread:$0]  %s415, 2048, %s417, %s406, 128, 128, 8
        $region44: #{tpu_custom_call.1} parent=31 // pred_fallthru
          _
        // Predicated region
        $region45: #{tpu_custom_call.1} parent=31 // pred_check
          %p423 = pneg %p186
        $region46: #{tpu_custom_call.1} parent=31 // pred_check_branch
          %425 = sbr.rel (%p423) target = $region48
        $region47: #{tpu_custom_call.1} parent=31 // pred_region
          %s426 = sand.u32 %s32, 1
          %s427 = scalar_lea.sflag [#allocation9], %s426
          %s428 = sand.u32 %s176, 1
          %s429 = smul.addr %s428, 128
          %s430 = scalar_lea.vmem [#allocation10], %s429
          %s431 = smul.u32 16, %s40
          %s433 = ssub.s32 2048, 2048
          %434 = vsyncadd %s427, %s433
          %s435 = smul.addr %s431, 128
          %s436 = scalar_lea.hbm %s5, %s435
          %s437 = sshll.u32 %s430, 4
          %s438 = int_to_ptr.vmem [resolvable:$true] %s437
          %443 = dma.hbm_to_vmem [thread:$0]  %s436, 2048, %s438, %s427, 128, 128, 8
        $region48: #{tpu_custom_call.1} parent=31 // pred_fallthru
          _
      $region32: #{tpu_custom_call.1} parent=5 // pred_fallthru
        _
      %p444 = scmp.le.s32.totalorder 1, %s32
      %p445 = scmp.lt.s32.totalorder %s32, 5
      %p446 = pnand %p444, %p445
      %p447 = pneg %p446
      // Predicated region
      $region49: #{tpu_custom_call.1} parent=5 // pred_check
        _
      $region50: #{tpu_custom_call.1} parent=5 // pred_check_branch
        %449 = sbr.rel (%p446) target = $region52
      $region51: #{tpu_custom_call.1} parent=5 // pred_region
        %s450 = ssub.s32 %s32, 1
        %s451 = sand.u32 %s59, 1
        %s452 = scalar_lea.sflag [#allocation3], %s451
        %s453 = sand.u32 %s59, 1
        %s454 = smul.addr %s453, 256
        %s455 = scalar_lea.vmem [#allocation2], %s454
        // Predicated region
        $region53: #{tpu_custom_call.1} parent=51 // pred_check
          %p456 = pneg %p72
        $region54: #{tpu_custom_call.1} parent=51 // pred_check_branch
          %458 = sbr.rel (%p456) target = $region56
        $region55: #{tpu_custom_call.1} parent=51 // pred_region
          %459 = dma.done %s452, 4096
        $region56: #{tpu_custom_call.1} parent=51 // pred_fallthru
          _
        %s460 = sand.u32 %s37, 1
        %s461 = scalar_lea.sflag [#allocation6], %s460
        %s462 = sand.u32 %s85, 1
        %s463 = smul.addr %s462, 2
        %s464 = scalar_lea.vmem [#allocation5], %s463
        // Predicated region
        $region57: #{tpu_custom_call.1} parent=51 // pred_check
          %p465 = pneg %p98
        $region58: #{tpu_custom_call.1} parent=51 // pred_check_branch
          %467 = sbr.rel (%p465) target = $region60
        $region59: #{tpu_custom_call.1} parent=51 // pred_region
          %468 = dma.done %s461, 32
        $region60: #{tpu_custom_call.1} parent=51 // pred_fallthru
          _
        // Predicated region
        $region61: #{tpu_custom_call.1} parent=51 // pred_check
          %p469 = pneg %p140
        $region62: #{tpu_custom_call.1} parent=51 // pred_check_branch
          %471 = sbr.rel (%p469) target = $region64
        $region63: #{tpu_custom_call.1} parent=51 // pred_region
          %472 = dma.done [#allocation6], 8192
        $region64: #{tpu_custom_call.1} parent=51 // pred_fallthru
          _
        %s473 = sand.u32 %s37, 1
        %s474 = scalar_lea.sflag [#allocation9], %s473
        %s475 = sand.u32 %s153, 1
        %s476 = smul.addr %s475, 128
        %s477 = scalar_lea.vmem [#allocation8], %s476
        // Predicated region
        $region65: #{tpu_custom_call.1} parent=51 // pred_check
          %p478 = pneg %p166
        $region66: #{tpu_custom_call.1} parent=51 // pred_check_branch
          %480 = sbr.rel (%p478) target = $region68
        $region67: #{tpu_custom_call.1} parent=51 // pred_region
          %481 = dma.done %s474, 2048
        $region68: #{tpu_custom_call.1} parent=51 // pred_fallthru
          _
        %s482 = sand.u32 %s37, 1
        %s483 = scalar_lea.sflag [#allocation9], %s482
        %s484 = sand.u32 %s179, 1
        %s485 = smul.addr %s484, 128
        %s486 = scalar_lea.vmem [#allocation10], %s485
        // Predicated region
        $region69: #{tpu_custom_call.1} parent=51 // pred_check
          %p487 = pneg %p192
        $region70: #{tpu_custom_call.1} parent=51 // pred_check_branch
          %489 = sbr.rel (%p487) target = $region72
        $region71: #{tpu_custom_call.1} parent=51 // pred_region
          %490 = dma.done %s483, 2048
        $region72: #{tpu_custom_call.1} parent=51 // pred_fallthru
          _
        %s491 = sand.u32 %s59, 1
        %s492 = scalar_lea.sflag [#allocation3], %s491
        %s493 = sand.u32 %s59, 1
        %s494 = smul.addr %s493, 256
        %s495 = scalar_lea.vmem [#allocation2], %s494
        %p496 = pneg %p72
        %p497 = pneg %p69
        %s498 = sand.u32 %s37, 1
        %s499 = scalar_lea.sflag [#allocation6], %s498
        %s500 = sand.u32 %s85, 1
        %s501 = smul.addr %s500, 2
        %s502 = scalar_lea.vmem [#allocation5], %s501
        %p503 = pneg %p98
        %p504 = pneg %p95
        %p505 = pneg %p119
        %p506 = pneg %p116
        %p507 = pneg %p140
        %p508 = pneg %p137
        %s509 = sand.u32 %s37, 1
        %s510 = scalar_lea.sflag [#allocation9], %s509
        %s511 = sand.u32 %s153, 1
        %s512 = smul.addr %s511, 128
        %s513 = scalar_lea.vmem [#allocation8], %s512
        %p514 = pneg %p166
        %p515 = pneg %p163
        %s516 = sand.u32 %s37, 1
        %s517 = scalar_lea.sflag [#allocation9], %s516
        %s518 = sand.u32 %s179, 1
        %s519 = smul.addr %s518, 128
        %s520 = scalar_lea.vmem [#allocation10], %s519
        %p521 = pneg %p192
        %p522 = pneg %p189
        %p523 = pneg %p213
        %p524 = pneg %p210
        %p525 = pneg %p234
        %p526 = pneg %p231
        %p527 = pneg %p262
        %p528 = pneg %p259
        %s529 = sand.u32 %s249, 1
        %s530 = scalar_lea.sflag [#allocation4], %s529
        %s531 = sand.u32 %s249, 1
        %s532 = smul.addr %s531, 128
        %s533 = scalar_lea.vmem [#allocation11], %s532
        %p534 = pneg %p290
        %p535 = pneg %p287
        %s536 = sand.u32 %s37, 1
        %s537 = scalar_lea.sflag [#allocation13], %s536
        %s538 = sand.u32 %s277, 1
        %s539 = smul.addr %s538, 64
        %s540 = scalar_lea.vmem [#allocation12], %s539
        %p541 = pneg %p318
        %p542 = pneg %p315
        %s543 = sand.u32 %s37, 1
        %s544 = scalar_lea.sflag [#allocation13], %s543
        %s545 = sand.u32 %s305, 1
        %s546 = smul.addr %s545, 64
        %s547 = scalar_lea.vmem [#allocation14], %s546
        %s548 = smul.u32 16, %s42
        %s549 = smul.u32 16, %s42
        %s550 = smul.u32 16, %s42
        %s551 = smul.u32 16, %s42
        %s552 = smul.u32 16, %s42
        %s553 = smul.u32 16, %s42
        %v554 = vld [vmem:[%s455] sm:$0xff]
        %v555 = vld [vmem:[%s455 + $0x8] sm:$0xff]
        %v556 = vld [vmem:[%s455 + $0x10] sm:$0xff]
        %v557 = vld [vmem:[%s455 + $0x18] sm:$0xff]
        %v558 = vld [vmem:[%s455 + $0x20] sm:$0xff]
        %v559 = vld [vmem:[%s455 + $0x28] sm:$0xff]
        %v560 = vld [vmem:[%s455 + $0x30] sm:$0xff]
        %v561 = vld [vmem:[%s455 + $0x38] sm:$0xff]
        %v562 = vld [vmem:[%s455 + $0x40] sm:$0xff]
        %v563 = vld [vmem:[%s455 + $0x48] sm:$0xff]
        %v564 = vld [vmem:[%s455 + $0x50] sm:$0xff]
        %v565 = vld [vmem:[%s455 + $0x58] sm:$0xff]
        %v566 = vld [vmem:[%s455 + $0x60] sm:$0xff]
        %v567 = vld [vmem:[%s455 + $0x68] sm:$0xff]
        %v568 = vld [vmem:[%s455 + $0x70] sm:$0xff]
        %v569 = vld [vmem:[%s455 + $0x78] sm:$0xff]
        %v570 = vld [vmem:[%s455 + $0x80] sm:$0xff]
        %v571 = vld [vmem:[%s455 + $0x88] sm:$0xff]
        %v572 = vld [vmem:[%s455 + $0x90] sm:$0xff]
        %v573 = vld [vmem:[%s455 + $0x98] sm:$0xff]
        %v574 = vld [vmem:[%s455 + $0xa0] sm:$0xff]
        %v575 = vld [vmem:[%s455 + $0xa8] sm:$0xff]
        %v576 = vld [vmem:[%s455 + $0xb0] sm:$0xff]
        %v577 = vld [vmem:[%s455 + $0xb8] sm:$0xff]
        %v578 = vld [vmem:[%s455 + $0xc0] sm:$0xff]
        %v579 = vld [vmem:[%s455 + $0xc8] sm:$0xff]
        %v580 = vld [vmem:[%s455 + $0xd0] sm:$0xff]
        %v581 = vld [vmem:[%s455 + $0xd8] sm:$0xff]
        %v582 = vld [vmem:[%s455 + $0xe0] sm:$0xff]
        %v583 = vld [vmem:[%s455 + $0xe8] sm:$0xff]
        %v584 = vld [vmem:[%s455 + $0xf0] sm:$0xff]
        %v585 = vld [vmem:[%s455 + $0xf8] sm:$0xff]
        %v586 = vld [vmem:[%s2] sm:$0x3]
        %v587 = vmul.f32 %v554, %v554
        %v588 = vmul.f32 %v555, %v555
        %v589 = vmul.f32 %v556, %v556
        %v590 = vmul.f32 %v557, %v557
        %v591 = vmul.f32 %v558, %v558
        %v592 = vmul.f32 %v559, %v559
        %v593 = vmul.f32 %v560, %v560
        %v594 = vmul.f32 %v561, %v561
        %v595 = vmul.f32 %v562, %v562
        %v596 = vmul.f32 %v563, %v563
        %v597 = vmul.f32 %v564, %v564
        %v598 = vmul.f32 %v565, %v565
        %v599 = vmul.f32 %v566, %v566
        %v600 = vmul.f32 %v567, %v567
        %v601 = vmul.f32 %v568, %v568
        %v602 = vmul.f32 %v569, %v569
        %v603 = vmul.f32 %v570, %v570
        %v604 = vmul.f32 %v571, %v571
        %v605 = vmul.f32 %v572, %v572
        %v606 = vmul.f32 %v573, %v573
        %v607 = vmul.f32 %v574, %v574
        %v608 = vmul.f32 %v575, %v575
        %v609 = vmul.f32 %v576, %v576
        %v610 = vmul.f32 %v577, %v577
        %v611 = vmul.f32 %v578, %v578
        %v612 = vmul.f32 %v579, %v579
        %v613 = vmul.f32 %v580, %v580
        %v614 = vmul.f32 %v581, %v581
        %v615 = vmul.f32 %v582, %v582
        %v616 = vmul.f32 %v583, %v583
        %v617 = vmul.f32 %v584, %v584
        %v618 = vmul.f32 %v585, %v585
        %v619 = vadd.f32 %v587, %v588
        %620 = vadd.xlane.f32.xlu0 %v619
        %v621 = vpop.xlane.xlu0 %620
        %v622 = vadd.f32 %v589, %v590
        %623 = vadd.xlane.f32.xlu0 %v622
        %v624 = vpop.xlane.xlu0 %623
        %v625 = vadd.f32 %v591, %v592
        %626 = vadd.xlane.f32.xlu0 %v625
        %v627 = vpop.xlane.xlu0 %626
        %v628 = vadd.f32 %v593, %v594
        %629 = vadd.xlane.f32.xlu0 %v628
        %v630 = vpop.xlane.xlu0 %629
        %v631 = vadd.f32 %v595, %v596
        %632 = vadd.xlane.f32.xlu0 %v631
        %v633 = vpop.xlane.xlu0 %632
        %v634 = vadd.f32 %v597, %v598
        %635 = vadd.xlane.f32.xlu0 %v634
        %v636 = vpop.xlane.xlu0 %635
        %v637 = vadd.f32 %v599, %v600
        %638 = vadd.xlane.f32.xlu0 %v637
        %v639 = vpop.xlane.xlu0 %638
        %v640 = vadd.f32 %v601, %v602
        %641 = vadd.xlane.f32.xlu0 %v640
        %v642 = vpop.xlane.xlu0 %641
        %v643 = vadd.f32 %v603, %v604
        %644 = vadd.xlane.f32.xlu0 %v643
        %v645 = vpop.xlane.xlu0 %644
        %v646 = vadd.f32 %v605, %v606
        %647 = vadd.xlane.f32.xlu0 %v646
        %v648 = vpop.xlane.xlu0 %647
        %v649 = vadd.f32 %v607, %v608
        %650 = vadd.xlane.f32.xlu0 %v649
        %v651 = vpop.xlane.xlu0 %650
        %v652 = vadd.f32 %v609, %v610
        %653 = vadd.xlane.f32.xlu0 %v652
        %v654 = vpop.xlane.xlu0 %653
        %v655 = vadd.f32 %v611, %v612
        %656 = vadd.xlane.f32.xlu0 %v655
        %v657 = vpop.xlane.xlu0 %656
        %v658 = vadd.f32 %v613, %v614
        %659 = vadd.xlane.f32.xlu0 %v658
        %v660 = vpop.xlane.xlu0 %659
        %v661 = vadd.f32 %v615, %v616
        %662 = vadd.xlane.f32.xlu0 %v661
        %v663 = vpop.xlane.xlu0 %662
        %v664 = vadd.f32 %v617, %v618
        %665 = vadd.xlane.f32.xlu0 %v664
        %v666 = vpop.xlane.xlu0 %665
        %v667 = vrcp.pop 256.0
        %v668 = vmul.f32 %v621, %v667
        %v669 = vmul.f32 %v624, %v667
        %v670 = vmul.f32 %v627, %v667
        %v671 = vmul.f32 %v630, %v667
        %v672 = vmul.f32 %v633, %v667
        %v673 = vmul.f32 %v636, %v667
        %v674 = vmul.f32 %v639, %v667
        %v675 = vmul.f32 %v642, %v667
        %v676 = vmul.f32 %v645, %v667
        %v677 = vmul.f32 %v648, %v667
        %v678 = vmul.f32 %v651, %v667
        %v679 = vmul.f32 %v654, %v667
        %v680 = vmul.f32 %v657, %v667
        %v681 = vmul.f32 %v660, %v667
        %v682 = vmul.f32 %v663, %v667
        %v683 = vmul.f32 %v666, %v667
        %v684 = vadd.f32 %v668, 1e-05
        %v685 = vadd.f32 %v669, 1e-05
        %v686 = vadd.f32 %v670, 1e-05
        %v687 = vadd.f32 %v671, 1e-05
        %v688 = vadd.f32 %v672, 1e-05
        %v689 = vadd.f32 %v673, 1e-05
        %v690 = vadd.f32 %v674, 1e-05
        %v691 = vadd.f32 %v675, 1e-05
        %v692 = vadd.f32 %v676, 1e-05
        %v693 = vadd.f32 %v677, 1e-05
        %v694 = vadd.f32 %v678, 1e-05
        %v695 = vadd.f32 %v679, 1e-05
        %v696 = vadd.f32 %v680, 1e-05
        %v697 = vadd.f32 %v681, 1e-05
        %v698 = vadd.f32 %v682, 1e-05
        %v699 = vadd.f32 %v683, 1e-05
        %v700 = vrsqrt.pop %v684
        %v701 = vrsqrt.pop %v685
        %v702 = vrsqrt.pop %v686
        %v703 = vrsqrt.pop %v687
        %v704 = vrsqrt.pop %v688
        %v705 = vrsqrt.pop %v689
        %v706 = vrsqrt.pop %v690
        %v707 = vrsqrt.pop %v691
        %v708 = vrsqrt.pop %v692
        %v709 = vrsqrt.pop %v693
        %v710 = vrsqrt.pop %v694
        %v711 = vrsqrt.pop %v695
        %v712 = vrsqrt.pop %v696
        %v713 = vrsqrt.pop %v697
        %v714 = vrsqrt.pop %v698
        %v715 = vrsqrt.pop %v699
        %v716 = vmul.f32 %v554, %v700
        %v717 = vmul.f32 %v555, %v700
        %v718 = vmul.f32 %v556, %v701
        %v719 = vmul.f32 %v557, %v701
        %v720 = vmul.f32 %v558, %v702
        %v721 = vmul.f32 %v559, %v702
        %v722 = vmul.f32 %v560, %v703
        %v723 = vmul.f32 %v561, %v703
        %v724 = vmul.f32 %v562, %v704
        %v725 = vmul.f32 %v563, %v704
        %v726 = vmul.f32 %v564, %v705
        %v727 = vmul.f32 %v565, %v705
        %v728 = vmul.f32 %v566, %v706
        %v729 = vmul.f32 %v567, %v706
        %v730 = vmul.f32 %v568, %v707
        %v731 = vmul.f32 %v569, %v707
        %v732 = vmul.f32 %v570, %v708
        %v733 = vmul.f32 %v571, %v708
        %v734 = vmul.f32 %v572, %v709
        %v735 = vmul.f32 %v573, %v709
        %v736 = vmul.f32 %v574, %v710
        %v737 = vmul.f32 %v575, %v710
        %v738 = vmul.f32 %v576, %v711
        %v739 = vmul.f32 %v577, %v711
        %v740 = vmul.f32 %v578, %v712
        %v741 = vmul.f32 %v579, %v712
        %v742 = vmul.f32 %v580, %v713
        %v743 = vmul.f32 %v581, %v713
        %v744 = vmul.f32 %v582, %v714
        %v745 = vmul.f32 %v583, %v714
        %v746 = vmul.f32 %v584, %v715
        %v747 = vmul.f32 %v585, %v715
        %v749 = vlaneseq
        %v750 = vshrl.u32 %v749, 7
        %v751 = vsub.s32 0, %v750
        %v752 = vrot.slane %v586, %v751
        %v753 = vlaneseq
        %v754 = vshrl.u32 %v753, 7
        %v755 = vsub.s32 1, %v754
        %v756 = vrot.slane %v586, %v755
        %v759 = vmul.f32 %v716, %v752
        %v760 = vmul.f32 %v717, %v756
        %v761 = vmul.f32 %v718, %v752
        %v762 = vmul.f32 %v719, %v756
        %v763 = vmul.f32 %v720, %v752
        %v764 = vmul.f32 %v721, %v756
        %v765 = vmul.f32 %v722, %v752
        %v766 = vmul.f32 %v723, %v756
        %v767 = vmul.f32 %v724, %v752
        %v768 = vmul.f32 %v725, %v756
        %v769 = vmul.f32 %v726, %v752
        %v770 = vmul.f32 %v727, %v756
        %v771 = vmul.f32 %v728, %v752
        %v772 = vmul.f32 %v729, %v756
        %v773 = vmul.f32 %v730, %v752
        %v774 = vmul.f32 %v731, %v756
        %v775 = vmul.f32 %v732, %v752
        %v776 = vmul.f32 %v733, %v756
        %v777 = vmul.f32 %v734, %v752
        %v778 = vmul.f32 %v735, %v756
        %v779 = vmul.f32 %v736, %v752
        %v780 = vmul.f32 %v737, %v756
        %v781 = vmul.f32 %v738, %v752
        %v782 = vmul.f32 %v739, %v756
        %v783 = vmul.f32 %v740, %v752
        %v784 = vmul.f32 %v741, %v756
        %v785 = vmul.f32 %v742, %v752
        %v786 = vmul.f32 %v743, %v756
        %v787 = vmul.f32 %v744, %v752
        %v788 = vmul.f32 %v745, %v756
        %v789 = vmul.f32 %v746, %v752
        %v790 = vmul.f32 %v747, %v756
        %v791 = vld [vmem:[%s464] sm:$0x3]
        %v792 = vadd.f32 %v791, 1.0
        %v794 = vlaneseq
        %v795 = vshrl.u32 %v794, 7
        %v796 = vsub.s32 0, %v795
        %v797 = vrot.slane %v792, %v796
        %v798 = vlaneseq
        %v799 = vshrl.u32 %v798, 7
        %v800 = vsub.s32 1, %v799
        %v801 = vrot.slane %v792, %v800
        %v804 = vmul.f32 %v759, %v797
        %v805 = vmul.f32 %v760, %v801
        %v806 = vmul.f32 %v761, %v797
        %v807 = vmul.f32 %v762, %v801
        %v808 = vmul.f32 %v763, %v797
        %v809 = vmul.f32 %v764, %v801
        %v810 = vmul.f32 %v765, %v797
        %v811 = vmul.f32 %v766, %v801
        %v812 = vmul.f32 %v767, %v797
        %v813 = vmul.f32 %v768, %v801
        %v814 = vmul.f32 %v769, %v797
        %v815 = vmul.f32 %v770, %v801
        %v816 = vmul.f32 %v771, %v797
        %v817 = vmul.f32 %v772, %v801
        %v818 = vmul.f32 %v773, %v797
        %v819 = vmul.f32 %v774, %v801
        %v820 = vmul.f32 %v775, %v797
        %v821 = vmul.f32 %v776, %v801
        %v822 = vmul.f32 %v777, %v797
        %v823 = vmul.f32 %v778, %v801
        %v824 = vmul.f32 %v779, %v797
        %v825 = vmul.f32 %v780, %v801
        %v826 = vmul.f32 %v781, %v797
        %v827 = vmul.f32 %v782, %v801
        %v828 = vmul.f32 %v783, %v797
        %v829 = vmul.f32 %v784, %v801
        %v830 = vmul.f32 %v785, %v797
        %v831 = vmul.f32 %v786, %v801
        %v832 = vmul.f32 %v787, %v797
        %v833 = vmul.f32 %v788, %v801
        %v834 = vmul.f32 %v789, %v797
        %v835 = vmul.f32 %v790, %v801
        %v836 = vpack.c.bf16 %v806, %v804
        %v837 = vpack.c.bf16 %v807, %v805
        %v838 = vpack.c.bf16 %v810, %v808
        %v839 = vpack.c.bf16 %v811, %v809
        %v840 = vpack.c.bf16 %v814, %v812
        %v841 = vpack.c.bf16 %v815, %v813
        %v842 = vpack.c.bf16 %v818, %v816
        %v843 = vpack.c.bf16 %v819, %v817
        %v844 = vpack.c.bf16 %v822, %v820
        %v845 = vpack.c.bf16 %v823, %v821
        %v846 = vpack.c.bf16 %v826, %v824
        %v847 = vpack.c.bf16 %v827, %v825
        %v848 = vpack.c.bf16 %v830, %v828
        %v849 = vpack.c.bf16 %v831, %v829
        %v850 = vpack.c.bf16 %v834, %v832
        %v851 = vpack.c.bf16 %v835, %v833
        %v852 = vld [vmem:[#allocation7] sm:$0xff]
        %v853 = vld [vmem:[#allocation7 + $0x8] sm:$0xff]
        %v854 = vld [vmem:[#allocation7 + $0x10] sm:$0xff]
        %v855 = vld [vmem:[#allocation7 + $0x18] sm:$0xff]
        %v856 = vld [vmem:[#allocation7 + $0x20] sm:$0xff]
        %v857 = vld [vmem:[#allocation7 + $0x28] sm:$0xff]
        %v858 = vld [vmem:[#allocation7 + $0x30] sm:$0xff]
        %v859 = vld [vmem:[#allocation7 + $0x38] sm:$0xff]
        %v860 = vld [vmem:[#allocation7 + $0x40] sm:$0xff]
        %v861 = vld [vmem:[#allocation7 + $0x48] sm:$0xff]
        %v862 = vld [vmem:[#allocation7 + $0x50] sm:$0xff]
        %v863 = vld [vmem:[#allocation7 + $0x58] sm:$0xff]
        %v864 = vld [vmem:[#allocation7 + $0x60] sm:$0xff]
        %v865 = vld [vmem:[#allocation7 + $0x68] sm:$0xff]
        %v866 = vld [vmem:[#allocation7 + $0x70] sm:$0xff]
        %v867 = vld [vmem:[#allocation7 + $0x78] sm:$0xff]
        %v868 = vld [vmem:[#allocation7 + $0x80] sm:$0xff]
        %v869 = vld [vmem:[#allocation7 + $0x88] sm:$0xff]
        %v870 = vld [vmem:[#allocation7 + $0x90] sm:$0xff]
        %v871 = vld [vmem:[#allocation7 + $0x98] sm:$0xff]
        %v872 = vld [vmem:[#allocation7 + $0xa0] sm:$0xff]
        %v873 = vld [vmem:[#allocation7 + $0xa8] sm:$0xff]
        %v874 = vld [vmem:[#allocation7 + $0xb0] sm:$0xff]
        %v875 = vld [vmem:[#allocation7 + $0xb8] sm:$0xff]
        %v876 = vld [vmem:[#allocation7 + $0xc0] sm:$0xff]
        %v877 = vld [vmem:[#allocation7 + $0xc8] sm:$0xff]
        %v878 = vld [vmem:[#allocation7 + $0xd0] sm:$0xff]
        %v879 = vld [vmem:[#allocation7 + $0xd8] sm:$0xff]
        %v880 = vld [vmem:[#allocation7 + $0xe0] sm:$0xff]
        %v881 = vld [vmem:[#allocation7 + $0xe8] sm:$0xff]
        %v882 = vld [vmem:[#allocation7 + $0xf0] sm:$0xff]
        %v883 = vld [vmem:[#allocation7 + $0xf8] sm:$0xff]
        %v884 = vld [vmem:[#allocation7 + $0x100] sm:$0xff]
        %v885 = vld [vmem:[#allocation7 + $0x108] sm:$0xff]
        %v886 = vld [vmem:[#allocation7 + $0x110] sm:$0xff]
        %v887 = vld [vmem:[#allocation7 + $0x118] sm:$0xff]
        %v888 = vld [vmem:[#allocation7 + $0x120] sm:$0xff]
        %v889 = vld [vmem:[#allocation7 + $0x128] sm:$0xff]
        %v890 = vld [vmem:[#allocation7 + $0x130] sm:$0xff]
        %v891 = vld [vmem:[#allocation7 + $0x138] sm:$0xff]
        %v892 = vld [vmem:[#allocation7 + $0x140] sm:$0xff]
        %v893 = vld [vmem:[#allocation7 + $0x148] sm:$0xff]
        %v894 = vld [vmem:[#allocation7 + $0x150] sm:$0xff]
        %v895 = vld [vmem:[#allocation7 + $0x158] sm:$0xff]
        %v896 = vld [vmem:[#allocation7 + $0x160] sm:$0xff]
        %v897 = vld [vmem:[#allocation7 + $0x168] sm:$0xff]
        %v898 = vld [vmem:[#allocation7 + $0x170] sm:$0xff]
        %v899 = vld [vmem:[#allocation7 + $0x178] sm:$0xff]
        %v900 = vld [vmem:[#allocation7 + $0x180] sm:$0xff]
        %v901 = vld [vmem:[#allocation7 + $0x188] sm:$0xff]
        %v902 = vld [vmem:[#allocation7 + $0x190] sm:$0xff]
        %v903 = vld [vmem:[#allocation7 + $0x198] sm:$0xff]
        %v904 = vld [vmem:[#allocation7 + $0x1a0] sm:$0xff]
        %v905 = vld [vmem:[#allocation7 + $0x1a8] sm:$0xff]
        %v906 = vld [vmem:[#allocation7 + $0x1b0] sm:$0xff]
        %v907 = vld [vmem:[#allocation7 + $0x1b8] sm:$0xff]
        %v908 = vld [vmem:[#allocation7 + $0x1c0] sm:$0xff]
        %v909 = vld [vmem:[#allocation7 + $0x1c8] sm:$0xff]
        %v910 = vld [vmem:[#allocation7 + $0x1d0] sm:$0xff]
        %v911 = vld [vmem:[#allocation7 + $0x1d8] sm:$0xff]
        %v912 = vld [vmem:[#allocation7 + $0x1e0] sm:$0xff]
        %v913 = vld [vmem:[#allocation7 + $0x1e8] sm:$0xff]
        %v914 = vld [vmem:[#allocation7 + $0x1f0] sm:$0xff]
        %v915 = vld [vmem:[#allocation7 + $0x1f8] sm:$0xff]
        %v980 = vunpack.c.l.b16 %v852
        %v981 = vunpack.c.h.b16 %v852
        %v982 = vunpack.c.l.b16 %v853
        %v983 = vunpack.c.h.b16 %v853
        %v984 = vunpack.c.l.b16 %v854
        %v985 = vunpack.c.h.b16 %v854
        %v986 = vunpack.c.l.b16 %v855
        %v987 = vunpack.c.h.b16 %v855
        %v988 = vunpack.c.l.b16 %v856
        %v989 = vunpack.c.h.b16 %v856
        %v990 = vunpack.c.l.b16 %v857
        %v991 = vunpack.c.h.b16 %v857
        %v992 = vunpack.c.l.b16 %v858
        %v993 = vunpack.c.h.b16 %v858
        %v994 = vunpack.c.l.b16 %v859
        %v995 = vunpack.c.h.b16 %v859
        %v996 = vunpack.c.l.b16 %v860
        %v997 = vunpack.c.h.b16 %v860
        %v998 = vunpack.c.l.b16 %v861
        %v999 = vunpack.c.h.b16 %v861
        %v1000 = vunpack.c.l.b16 %v862
        %v1001 = vunpack.c.h.b16 %v862
        %v1002 = vunpack.c.l.b16 %v863
        %v1003 = vunpack.c.h.b16 %v863
        %v1004 = vunpack.c.l.b16 %v864
        %v1005 = vunpack.c.h.b16 %v864
        %v1006 = vunpack.c.l.b16 %v865
        %v1007 = vunpack.c.h.b16 %v865
        %v1008 = vunpack.c.l.b16 %v866
        %v1009 = vunpack.c.h.b16 %v866
        %v1010 = vunpack.c.l.b16 %v867
        %v1011 = vunpack.c.h.b16 %v867
        %v1012 = vunpack.c.l.b16 %v868
        %v1013 = vunpack.c.h.b16 %v868
        %v1014 = vunpack.c.l.b16 %v869
        %v1015 = vunpack.c.h.b16 %v869
        %v1016 = vunpack.c.l.b16 %v870
        %v1017 = vunpack.c.h.b16 %v870
        %v1018 = vunpack.c.l.b16 %v871
        %v1019 = vunpack.c.h.b16 %v871
        %v1020 = vunpack.c.l.b16 %v872
        %v1021 = vunpack.c.h.b16 %v872
        %v1022 = vunpack.c.l.b16 %v873
        %v1023 = vunpack.c.h.b16 %v873
        %v1024 = vunpack.c.l.b16 %v874
        %v1025 = vunpack.c.h.b16 %v874
        %v1026 = vunpack.c.l.b16 %v875
        %v1027 = vunpack.c.h.b16 %v875
        %v1028 = vunpack.c.l.b16 %v876
        %v1029 = vunpack.c.h.b16 %v876
        %v1030 = vunpack.c.l.b16 %v877
        %v1031 = vunpack.c.h.b16 %v877
        %v1032 = vunpack.c.l.b16 %v878
        %v1033 = vunpack.c.h.b16 %v878
        %v1034 = vunpack.c.l.b16 %v879
        %v1035 = vunpack.c.h.b16 %v879
        %v1036 = vunpack.c.l.b16 %v880
        %v1037 = vunpack.c.h.b16 %v880
        %v1038 = vunpack.c.l.b16 %v881
        %v1039 = vunpack.c.h.b16 %v881
        %v1040 = vunpack.c.l.b16 %v882
        %v1041 = vunpack.c.h.b16 %v882
        %v1042 = vunpack.c.l.b16 %v883
        %v1043 = vunpack.c.h.b16 %v883
        %v1044 = vunpack.c.l.b16 %v884
        %v1045 = vunpack.c.h.b16 %v884
        %v1046 = vunpack.c.l.b16 %v885
        %v1047 = vunpack.c.h.b16 %v885
        %v1048 = vunpack.c.l.b16 %v886
        %v1049 = vunpack.c.h.b16 %v886
        %v1050 = vunpack.c.l.b16 %v887
        %v1051 = vunpack.c.h.b16 %v887
        %v1052 = vunpack.c.l.b16 %v888
        %v1053 = vunpack.c.h.b16 %v888
        %v1054 = vunpack.c.l.b16 %v889
        %v1055 = vunpack.c.h.b16 %v889
        %v1056 = vunpack.c.l.b16 %v890
        %v1057 = vunpack.c.h.b16 %v890
        %v1058 = vunpack.c.l.b16 %v891
        %v1059 = vunpack.c.h.b16 %v891
        %v1060 = vunpack.c.l.b16 %v892
        %v1061 = vunpack.c.h.b16 %v892
        %v1062 = vunpack.c.l.b16 %v893
        %v1063 = vunpack.c.h.b16 %v893
        %v1064 = vunpack.c.l.b16 %v894
        %v1065 = vunpack.c.h.b16 %v894
        %v1066 = vunpack.c.l.b16 %v895
        %v1067 = vunpack.c.h.b16 %v895
        %v1068 = vunpack.c.l.b16 %v896
        %v1069 = vunpack.c.h.b16 %v896
        %v1070 = vunpack.c.l.b16 %v897
        %v1071 = vunpack.c.h.b16 %v897
        %v1072 = vunpack.c.l.b16 %v898
        %v1073 = vunpack.c.h.b16 %v898
        %v1074 = vunpack.c.l.b16 %v899
        %v1075 = vunpack.c.h.b16 %v899
        %v1076 = vunpack.c.l.b16 %v900
        %v1077 = vunpack.c.h.b16 %v900
        %v1078 = vunpack.c.l.b16 %v901
        %v1079 = vunpack.c.h.b16 %v901
        %v1080 = vunpack.c.l.b16 %v902
        %v1081 = vunpack.c.h.b16 %v902
        %v1082 = vunpack.c.l.b16 %v903
        %v1083 = vunpack.c.h.b16 %v903
        %v1084 = vunpack.c.l.b16 %v904
        %v1085 = vunpack.c.h.b16 %v904
        %v1086 = vunpack.c.l.b16 %v905
        %v1087 = vunpack.c.h.b16 %v905
        %v1088 = vunpack.c.l.b16 %v906
        %v1089 = vunpack.c.h.b16 %v906
        %v1090 = vunpack.c.l.b16 %v907
        %v1091 = vunpack.c.h.b16 %v907
        %v1092 = vunpack.c.l.b16 %v908
        %v1093 = vunpack.c.h.b16 %v908
        %v1094 = vunpack.c.l.b16 %v909
        %v1095 = vunpack.c.h.b16 %v909
        %v1096 = vunpack.c.l.b16 %v910
        %v1097 = vunpack.c.h.b16 %v910
        %v1098 = vunpack.c.l.b16 %v911
        %v1099 = vunpack.c.h.b16 %v911
        %v1100 = vunpack.c.l.b16 %v912
        %v1101 = vunpack.c.h.b16 %v912
        %v1102 = vunpack.c.l.b16 %v913
        %v1103 = vunpack.c.h.b16 %v913
        %v1104 = vunpack.c.l.b16 %v914
        %v1105 = vunpack.c.h.b16 %v914
        %v1106 = vunpack.c.l.b16 %v915
        %v1107 = vunpack.c.h.b16 %v915
        %v1108 = vpack.c.b16 %v984, %v980
        %v1109 = vpack.c.b16 %v985, %v981
        %v1110 = vpack.c.b16 %v986, %v982
        %v1111 = vpack.c.b16 %v987, %v983
        %v1112 = vpack.c.b16 %v992, %v988
        %v1113 = vpack.c.b16 %v993, %v989
        %v1114 = vpack.c.b16 %v994, %v990
        %v1115 = vpack.c.b16 %v995, %v991
        %v1116 = vpack.c.b16 %v1000, %v996
        %v1117 = vpack.c.b16 %v1001, %v997
        %v1118 = vpack.c.b16 %v1002, %v998
        %v1119 = vpack.c.b16 %v1003, %v999
        %v1120 = vpack.c.b16 %v1008, %v1004
        %v1121 = vpack.c.b16 %v1009, %v1005
        %v1122 = vpack.c.b16 %v1010, %v1006
        %v1123 = vpack.c.b16 %v1011, %v1007
        %v1124 = vpack.c.b16 %v1016, %v1012
        %v1125 = vpack.c.b16 %v1017, %v1013
        %v1126 = vpack.c.b16 %v1018, %v1014
        %v1127 = vpack.c.b16 %v1019, %v1015
        %v1128 = vpack.c.b16 %v1024, %v1020
        %v1129 = vpack.c.b16 %v1025, %v1021
        %v1130 = vpack.c.b16 %v1026, %v1022
        %v1131 = vpack.c.b16 %v1027, %v1023
        %v1132 = vpack.c.b16 %v1032, %v1028
        %v1133 = vpack.c.b16 %v1033, %v1029
        %v1134 = vpack.c.b16 %v1034, %v1030
        %v1135 = vpack.c.b16 %v1035, %v1031
        %v1136 = vpack.c.b16 %v1040, %v1036
        %v1137 = vpack.c.b16 %v1041, %v1037
        %v1138 = vpack.c.b16 %v1042, %v1038
        %v1139 = vpack.c.b16 %v1043, %v1039
        %v1140 = vpack.c.b16 %v1048, %v1044
        %v1141 = vpack.c.b16 %v1049, %v1045
        %v1142 = vpack.c.b16 %v1050, %v1046
        %v1143 = vpack.c.b16 %v1051, %v1047
        %v1144 = vpack.c.b16 %v1056, %v1052
        %v1145 = vpack.c.b16 %v1057, %v1053
        %v1146 = vpack.c.b16 %v1058, %v1054
        %v1147 = vpack.c.b16 %v1059, %v1055
        %v1148 = vpack.c.b16 %v1064, %v1060
        %v1149 = vpack.c.b16 %v1065, %v1061
        %v1150 = vpack.c.b16 %v1066, %v1062
        %v1151 = vpack.c.b16 %v1067, %v1063
        %v1152 = vpack.c.b16 %v1072, %v1068
        %v1153 = vpack.c.b16 %v1073, %v1069
        %v1154 = vpack.c.b16 %v1074, %v1070
        %v1155 = vpack.c.b16 %v1075, %v1071
        %v1156 = vpack.c.b16 %v1080, %v1076
        %v1157 = vpack.c.b16 %v1081, %v1077
        %v1158 = vpack.c.b16 %v1082, %v1078
        %v1159 = vpack.c.b16 %v1083, %v1079
        %v1160 = vpack.c.b16 %v1088, %v1084
        %v1161 = vpack.c.b16 %v1089, %v1085
        %v1162 = vpack.c.b16 %v1090, %v1086
        %v1163 = vpack.c.b16 %v1091, %v1087
        %v1164 = vpack.c.b16 %v1096, %v1092
        %v1165 = vpack.c.b16 %v1097, %v1093
        %v1166 = vpack.c.b16 %v1098, %v1094
        %v1167 = vpack.c.b16 %v1099, %v1095
        %v1168 = vpack.c.b16 %v1104, %v1100
        %v1169 = vpack.c.b16 %v1105, %v1101
        %v1170 = vpack.c.b16 %v1106, %v1102
        %v1171 = vpack.c.b16 %v1107, %v1103
        %1236 = vmatprep.subr.bf16.mxu0 %v1137
        %1237 = vmatpush1.bf16.msra.mxu0 %v1136
        %1238 = vmatprep.subr.bf16.mxu0 %v1133
        %1239 = vmatpush1.bf16.msra.mxu0 %v1132
        %1240 = vmatprep.subr.bf16.mxu0 %v1129
        %1241 = vmatpush1.bf16.msra.mxu0 %v1128
        %1242 = vmatprep.subr.bf16.mxu0 %v1125
        %1243 = vmatpush1.bf16.msra.mxu0 %v1124
        %1244 = vmatprep.subr.bf16.mxu0 %v1121
        %1245 = vmatpush1.bf16.msra.mxu0 %v1120
        %1246 = vmatprep.subr.bf16.mxu0 %v1117
        %1247 = vmatpush1.bf16.msra.mxu0 %v1116
        %1248 = vmatprep.subr.bf16.mxu0 %v1113
        %1249 = vmatpush1.bf16.msra.mxu0 %v1112
        %1250 = vmatprep.subr.bf16.mxu0 %v1109
        %1251 = vmatpush1.bf16.msra.mxu0 %v1108
        %1252 = vmatprep.subr.bf16.mxu0 %v1169
        %1253 = vmatpush2.bf16.msra.mxu0 %v1168
        %1254 = vmatprep.subr.bf16.mxu0 %v1165
        %1255 = vmatpush2.bf16.msra.mxu0 %v1164
        %1256 = vmatprep.subr.bf16.mxu0 %v1161
        %1257 = vmatpush2.bf16.msra.mxu0 %v1160
        %1258 = vmatprep.subr.bf16.mxu0 %v1157
        %1259 = vmatpush2.bf16.msra.mxu0 %v1156
        %1260 = vmatprep.subr.bf16.mxu0 %v1153
        %1261 = vmatpush2.bf16.msra.mxu0 %v1152
        %1262 = vmatprep.subr.bf16.mxu0 %v1149
        %1263 = vmatpush2.bf16.msra.mxu0 %v1148
        %1264 = vmatprep.subr.bf16.mxu0 %v1145
        %1265 = vmatpush2.bf16.msra.mxu0 %v1144
        %1266 = vmatprep.subr.bf16.mxu0 %v1141
        %1267 = vmatpush2.bf16.msra.mxu0 %v1140
        %1268 = vmatprep.mubr.bf16.mxu0 %v837
        %1269 = vmatmul.mubr.bf16.gmra.mxu0 %v836
        %v1270 = vpop.f32.mrf.mxu0
        %v1271 = vadd.f32 0.0, %v1270
        %v1272 = vpop.f32.mrf.mxu0
        %v1273 = vadd.f32 0.0, %v1272
        %v1274 = vpop.f32.mrf.mxu0
        %v1275 = vadd.f32 0.0, %v1274
        %v1276 = vpop.f32.mrf.mxu0
        %v1277 = vadd.f32 0.0, %v1276
        %1278 = vmatprep.mubr.bf16.mxu0 %v839
        %1279 = vmatmul.mubr.bf16.gmra.mxu0 %v838
        %v1280 = vpop.f32.mrf.mxu0
        %v1281 = vadd.f32 0.0, %v1280
        %v1282 = vpop.f32.mrf.mxu0
        %v1283 = vadd.f32 0.0, %v1282
        %v1284 = vpop.f32.mrf.mxu0
        %v1285 = vadd.f32 0.0, %v1284
        %v1286 = vpop.f32.mrf.mxu0
        %v1287 = vadd.f32 0.0, %v1286
        %1288 = vmatprep.mubr.bf16.mxu0 %v841
        %1289 = vmatmul.mubr.bf16.gmra.mxu0 %v840
        %v1290 = vpop.f32.mrf.mxu0
        %v1291 = vadd.f32 0.0, %v1290
        %v1292 = vpop.f32.mrf.mxu0
        %v1293 = vadd.f32 0.0, %v1292
        %v1294 = vpop.f32.mrf.mxu0
        %v1295 = vadd.f32 0.0, %v1294
        %v1296 = vpop.f32.mrf.mxu0
        %v1297 = vadd.f32 0.0, %v1296
        %1298 = vmatprep.mubr.bf16.mxu0 %v843
        %1299 = vmatmul.mubr.bf16.gmra.mxu0 %v842
        %v1300 = vpop.f32.mrf.mxu0
        %v1301 = vadd.f32 0.0, %v1300
        %v1302 = vpop.f32.mrf.mxu0
        %v1303 = vadd.f32 0.0, %v1302
        %v1304 = vpop.f32.mrf.mxu0
        %v1305 = vadd.f32 0.0, %v1304
        %v1306 = vpop.f32.mrf.mxu0
        %v1307 = vadd.f32 0.0, %v1306
        %1308 = vmatprep.mubr.bf16.mxu0 %v845
        %1309 = vmatmul.mubr.bf16.gmra.mxu0 %v844
        %v1310 = vpop.f32.mrf.mxu0
        %v1311 = vadd.f32 0.0, %v1310
        %v1312 = vpop.f32.mrf.mxu0
        %v1313 = vadd.f32 0.0, %v1312
        %v1314 = vpop.f32.mrf.mxu0
        %v1315 = vadd.f32 0.0, %v1314
        %v1316 = vpop.f32.mrf.mxu0
        %v1317 = vadd.f32 0.0, %v1316
        %1318 = vmatprep.mubr.bf16.mxu0 %v847
        %1319 = vmatmul.mubr.bf16.gmra.mxu0 %v846
        %v1320 = vpop.f32.mrf.mxu0
        %v1321 = vadd.f32 0.0, %v1320
        %v1322 = vpop.f32.mrf.mxu0
        %v1323 = vadd.f32 0.0, %v1322
        %v1324 = vpop.f32.mrf.mxu0
        %v1325 = vadd.f32 0.0, %v1324
        %v1326 = vpop.f32.mrf.mxu0
        %v1327 = vadd.f32 0.0, %v1326
        %1328 = vmatprep.mubr.bf16.mxu0 %v849
        %1329 = vmatmul.mubr.bf16.gmra.mxu0 %v848
        %v1330 = vpop.f32.mrf.mxu0
        %v1331 = vadd.f32 0.0, %v1330
        %v1332 = vpop.f32.mrf.mxu0
        %v1333 = vadd.f32 0.0, %v1332
        %v1334 = vpop.f32.mrf.mxu0
        %v1335 = vadd.f32 0.0, %v1334
        %v1336 = vpop.f32.mrf.mxu0
        %v1337 = vadd.f32 0.0, %v1336
        %1338 = vmatprep.mubr.bf16.mxu0 %v851
        %1339 = vmatmul.mubr.bf16.gmra.mxu0 %v850
        %v1340 = vpop.f32.mrf.mxu0
        %v1341 = vadd.f32 0.0, %v1340
        %v1342 = vpop.f32.mrf.mxu0
        %v1343 = vadd.f32 0.0, %v1342
        %v1344 = vpop.f32.mrf.mxu0
        %v1345 = vadd.f32 0.0, %v1344
        %v1346 = vpop.f32.mrf.mxu0
        %v1347 = vadd.f32 0.0, %v1346
        %1348 = vdwg.mxu0
        %1349 = vmatprep.subr.bf16.mxu0 %v1139
        %1350 = vmatpush1.bf16.msra.mxu0 %v1138
        %1351 = vmatprep.subr.bf16.mxu0 %v1135
        %1352 = vmatpush1.bf16.msra.mxu0 %v1134
        %1353 = vmatprep.subr.bf16.mxu0 %v1131
        %1354 = vmatpush1.bf16.msra.mxu0 %v1130
        %1355 = vmatprep.subr.bf16.mxu0 %v1127
        %1356 = vmatpush1.bf16.msra.mxu0 %v1126
        %1357 = vmatprep.subr.bf16.mxu0 %v1123
        %1358 = vmatpush1.bf16.msra.mxu0 %v1122
        %1359 = vmatprep.subr.bf16.mxu0 %v1119
        %1360 = vmatpush1.bf16.msra.mxu0 %v1118
        %1361 = vmatprep.subr.bf16.mxu0 %v1115
        %1362 = vmatpush1.bf16.msra.mxu0 %v1114
        %1363 = vmatprep.subr.bf16.mxu0 %v1111
        %1364 = vmatpush1.bf16.msra.mxu0 %v1110
        %1365 = vmatprep.subr.bf16.mxu0 %v1171
        %1366 = vmatpush2.bf16.msra.mxu0 %v1170
        %1367 = vmatprep.subr.bf16.mxu0 %v1167
        %1368 = vmatpush2.bf16.msra.mxu0 %v1166
        %1369 = vmatprep.subr.bf16.mxu0 %v1163
        %1370 = vmatpush2.bf16.msra.mxu0 %v1162
        %1371 = vmatprep.subr.bf16.mxu0 %v1159
        %1372 = vmatpush2.bf16.msra.mxu0 %v1158
        %1373 = vmatprep.subr.bf16.mxu0 %v1155
        %1374 = vmatpush2.bf16.msra.mxu0 %v1154
        %1375 = vmatprep.subr.bf16.mxu0 %v1151
        %1376 = vmatpush2.bf16.msra.mxu0 %v1150
        %1377 = vmatprep.subr.bf16.mxu0 %v1147
        %1378 = vmatpush2.bf16.msra.mxu0 %v1146
        %1379 = vmatprep.subr.bf16.mxu0 %v1143
        %1380 = vmatpush2.bf16.msra.mxu0 %v1142
        %1381 = vmatprep.mubr.bf16.mxu0 %v837
        %1382 = vmatmul.mubr.bf16.gmra.mxu0 %v836
        %v1383 = vpop.f32.mrf.mxu0
        %v1384 = vadd.f32 0.0, %v1383
        %v1385 = vpop.f32.mrf.mxu0
        %v1386 = vadd.f32 0.0, %v1385
        %v1387 = vpop.f32.mrf.mxu0
        %v1388 = vadd.f32 0.0, %v1387
        %v1389 = vpop.f32.mrf.mxu0
        %v1390 = vadd.f32 0.0, %v1389
        %1391 = vmatprep.mubr.bf16.mxu0 %v839
        %1392 = vmatmul.mubr.bf16.gmra.mxu0 %v838
        %v1393 = vpop.f32.mrf.mxu0
        %v1394 = vadd.f32 0.0, %v1393
        %v1395 = vpop.f32.mrf.mxu0
        %v1396 = vadd.f32 0.0, %v1395
        %v1397 = vpop.f32.mrf.mxu0
        %v1398 = vadd.f32 0.0, %v1397
        %v1399 = vpop.f32.mrf.mxu0
        %v1400 = vadd.f32 0.0, %v1399
        %1401 = vmatprep.mubr.bf16.mxu0 %v841
        %1402 = vmatmul.mubr.bf16.gmra.mxu0 %v840
        %v1403 = vpop.f32.mrf.mxu0
        %v1404 = vadd.f32 0.0, %v1403
        %v1405 = vpop.f32.mrf.mxu0
        %v1406 = vadd.f32 0.0, %v1405
        %v1407 = vpop.f32.mrf.mxu0
        %v1408 = vadd.f32 0.0, %v1407
        %v1409 = vpop.f32.mrf.mxu0
        %v1410 = vadd.f32 0.0, %v1409
        %1411 = vmatprep.mubr.bf16.mxu0 %v843
        %1412 = vmatmul.mubr.bf16.gmra.mxu0 %v842
        %v1413 = vpop.f32.mrf.mxu0
        %v1414 = vadd.f32 0.0, %v1413
        %v1415 = vpop.f32.mrf.mxu0
        %v1416 = vadd.f32 0.0, %v1415
        %v1417 = vpop.f32.mrf.mxu0
        %v1418 = vadd.f32 0.0, %v1417
        %v1419 = vpop.f32.mrf.mxu0
        %v1420 = vadd.f32 0.0, %v1419
        %1421 = vmatprep.mubr.bf16.mxu0 %v845
        %1422 = vmatmul.mubr.bf16.gmra.mxu0 %v844
        %v1423 = vpop.f32.mrf.mxu0
        %v1424 = vadd.f32 0.0, %v1423
        %v1425 = vpop.f32.mrf.mxu0
        %v1426 = vadd.f32 0.0, %v1425
        %v1427 = vpop.f32.mrf.mxu0
        %v1428 = vadd.f32 0.0, %v1427
        %v1429 = vpop.f32.mrf.mxu0
        %v1430 = vadd.f32 0.0, %v1429
        %1431 = vmatprep.mubr.bf16.mxu0 %v847
        %1432 = vmatmul.mubr.bf16.gmra.mxu0 %v846
        %v1433 = vpop.f32.mrf.mxu0
        %v1434 = vadd.f32 0.0, %v1433
        %v1435 = vpop.f32.mrf.mxu0
        %v1436 = vadd.f32 0.0, %v1435
        %v1437 = vpop.f32.mrf.mxu0
        %v1438 = vadd.f32 0.0, %v1437
        %v1439 = vpop.f32.mrf.mxu0
        %v1440 = vadd.f32 0.0, %v1439
        %1441 = vmatprep.mubr.bf16.mxu0 %v849
        %1442 = vmatmul.mubr.bf16.gmra.mxu0 %v848
        %v1443 = vpop.f32.mrf.mxu0
        %v1444 = vadd.f32 0.0, %v1443
        %v1445 = vpop.f32.mrf.mxu0
        %v1446 = vadd.f32 0.0, %v1445
        %v1447 = vpop.f32.mrf.mxu0
        %v1448 = vadd.f32 0.0, %v1447
        %v1449 = vpop.f32.mrf.mxu0
        %v1450 = vadd.f32 0.0, %v1449
        %1451 = vmatprep.mubr.bf16.mxu0 %v851
        %1452 = vmatmul.mubr.bf16.gmra.mxu0 %v850
        %v1453 = vpop.f32.mrf.mxu0
        %v1454 = vadd.f32 0.0, %v1453
        %v1455 = vpop.f32.mrf.mxu0
        %v1456 = vadd.f32 0.0, %v1455
        %v1457 = vpop.f32.mrf.mxu0
        %v1458 = vadd.f32 0.0, %v1457
        %v1459 = vpop.f32.mrf.mxu0
        %v1460 = vadd.f32 0.0, %v1459
        %1461 = vdwg.mxu0
        %v1462 = vld [vmem:[%s477] sm:$0xff]
        %v1463 = vld [vmem:[%s477 + $0x8] sm:$0xff]
        %v1464 = vld [vmem:[%s477 + $0x10] sm:$0xff]
        %v1465 = vld [vmem:[%s477 + $0x18] sm:$0xff]
        %v1466 = vld [vmem:[%s477 + $0x20] sm:$0xff]
        %v1467 = vld [vmem:[%s477 + $0x28] sm:$0xff]
        %v1468 = vld [vmem:[%s477 + $0x30] sm:$0xff]
        %v1469 = vld [vmem:[%s477 + $0x38] sm:$0xff]
        %v1470 = vld [vmem:[%s477 + $0x40] sm:$0xff]
        %v1471 = vld [vmem:[%s477 + $0x48] sm:$0xff]
        %v1472 = vld [vmem:[%s477 + $0x50] sm:$0xff]
        %v1473 = vld [vmem:[%s477 + $0x58] sm:$0xff]
        %v1474 = vld [vmem:[%s477 + $0x60] sm:$0xff]
        %v1475 = vld [vmem:[%s477 + $0x68] sm:$0xff]
        %v1476 = vld [vmem:[%s477 + $0x70] sm:$0xff]
        %v1477 = vld [vmem:[%s477 + $0x78] sm:$0xff]
        %v1478 = vld [vmem:[%s486] sm:$0xff]
        %v1479 = vld [vmem:[%s486 + $0x8] sm:$0xff]
        %v1480 = vld [vmem:[%s486 + $0x10] sm:$0xff]
        %v1481 = vld [vmem:[%s486 + $0x18] sm:$0xff]
        %v1482 = vld [vmem:[%s486 + $0x20] sm:$0xff]
        %v1483 = vld [vmem:[%s486 + $0x28] sm:$0xff]
        %v1484 = vld [vmem:[%s486 + $0x30] sm:$0xff]
        %v1485 = vld [vmem:[%s486 + $0x38] sm:$0xff]
        %v1486 = vld [vmem:[%s486 + $0x40] sm:$0xff]
        %v1487 = vld [vmem:[%s486 + $0x48] sm:$0xff]
        %v1488 = vld [vmem:[%s486 + $0x50] sm:$0xff]
        %v1489 = vld [vmem:[%s486 + $0x58] sm:$0xff]
        %v1490 = vld [vmem:[%s486 + $0x60] sm:$0xff]
        %v1491 = vld [vmem:[%s486 + $0x68] sm:$0xff]
        %v1492 = vld [vmem:[%s486 + $0x70] sm:$0xff]
        %v1493 = vld [vmem:[%s486 + $0x78] sm:$0xff]
        %v1494 = vmul.f32 %v1462, 0.088388346
        %v1495 = vmul.f32 %v1463, 0.088388346
        %v1496 = vmul.f32 %v1464, 0.088388346
        %v1497 = vmul.f32 %v1465, 0.088388346
        %v1498 = vmul.f32 %v1466, 0.088388346
        %v1499 = vmul.f32 %v1467, 0.088388346
        %v1500 = vmul.f32 %v1468, 0.088388346
        %v1501 = vmul.f32 %v1469, 0.088388346
        %v1502 = vmul.f32 %v1470, 0.088388346
        %v1503 = vmul.f32 %v1471, 0.088388346
        %v1504 = vmul.f32 %v1472, 0.088388346
        %v1505 = vmul.f32 %v1473, 0.088388346
        %v1506 = vmul.f32 %v1474, 0.088388346
        %v1507 = vmul.f32 %v1475, 0.088388346
        %v1508 = vmul.f32 %v1476, 0.088388346
        %v1509 = vmul.f32 %v1477, 0.088388346
        %v1510 = vmul.f32 %v1478, 0.088388346
        %v1511 = vmul.f32 %v1479, 0.088388346
        %v1512 = vmul.f32 %v1480, 0.088388346
        %v1513 = vmul.f32 %v1481, 0.088388346
        %v1514 = vmul.f32 %v1482, 0.088388346
        %v1515 = vmul.f32 %v1483, 0.088388346
        %v1516 = vmul.f32 %v1484, 0.088388346
        %v1517 = vmul.f32 %v1485, 0.088388346
        %v1518 = vmul.f32 %v1486, 0.088388346
        %v1519 = vmul.f32 %v1487, 0.088388346
        %v1520 = vmul.f32 %v1488, 0.088388346
        %v1521 = vmul.f32 %v1489, 0.088388346
        %v1522 = vmul.f32 %v1490, 0.088388346
        %v1523 = vmul.f32 %v1491, 0.088388346
        %v1524 = vmul.f32 %v1492, 0.088388346
        %v1525 = vmul.f32 %v1493, 0.088388346
        %v1526 = vld [vmem:[%s6] sm:$0x1]
        %v1527 = vmul.f32 %v1271, %v1271
        %v1528 = vmul.f32 %v1275, %v1275
        %v1529 = vmul.f32 %v1281, %v1281
        %v1530 = vmul.f32 %v1285, %v1285
        %v1531 = vmul.f32 %v1291, %v1291
        %v1532 = vmul.f32 %v1295, %v1295
        %v1533 = vmul.f32 %v1301, %v1301
        %v1534 = vmul.f32 %v1305, %v1305
        %v1535 = vmul.f32 %v1311, %v1311
        %v1536 = vmul.f32 %v1315, %v1315
        %v1537 = vmul.f32 %v1321, %v1321
        %v1538 = vmul.f32 %v1325, %v1325
        %v1539 = vmul.f32 %v1331, %v1331
        %v1540 = vmul.f32 %v1335, %v1335
        %v1541 = vmul.f32 %v1341, %v1341
        %v1542 = vmul.f32 %v1345, %v1345
        %1543 = vadd.xlane.f32.xlu0 %v1527
        %v1544 = vpop.xlane.xlu0 %1543
        %1545 = vadd.xlane.f32.xlu0 %v1528
        %v1546 = vpop.xlane.xlu0 %1545
        %1547 = vadd.xlane.f32.xlu0 %v1529
        %v1548 = vpop.xlane.xlu0 %1547
        %1549 = vadd.xlane.f32.xlu0 %v1530
        %v1550 = vpop.xlane.xlu0 %1549
        %1551 = vadd.xlane.f32.xlu0 %v1531
        %v1552 = vpop.xlane.xlu0 %1551
        %1553 = vadd.xlane.f32.xlu0 %v1532
        %v1554 = vpop.xlane.xlu0 %1553
        %1555 = vadd.xlane.f32.xlu0 %v1533
        %v1556 = vpop.xlane.xlu0 %1555
        %1557 = vadd.xlane.f32.xlu0 %v1534
        %v1558 = vpop.xlane.xlu0 %1557
        %1559 = vadd.xlane.f32.xlu0 %v1535
        %v1560 = vpop.xlane.xlu0 %1559
        %1561 = vadd.xlane.f32.xlu0 %v1536
        %v1562 = vpop.xlane.xlu0 %1561
        %1563 = vadd.xlane.f32.xlu0 %v1537
        %v1564 = vpop.xlane.xlu0 %1563
        %1565 = vadd.xlane.f32.xlu0 %v1538
        %v1566 = vpop.xlane.xlu0 %1565
        %1567 = vadd.xlane.f32.xlu0 %v1539
        %v1568 = vpop.xlane.xlu0 %1567
        %1569 = vadd.xlane.f32.xlu0 %v1540
        %v1570 = vpop.xlane.xlu0 %1569
        %1571 = vadd.xlane.f32.xlu0 %v1541
        %v1572 = vpop.xlane.xlu0 %1571
        %1573 = vadd.xlane.f32.xlu0 %v1542
        %v1574 = vpop.xlane.xlu0 %1573
        %v1575 = vrcp.pop 128.0
        %v1576 = vmul.f32 %v1544, %v1575
        %v1577 = vmul.f32 %v1546, %v1575
        %v1578 = vmul.f32 %v1548, %v1575
        %v1579 = vmul.f32 %v1550, %v1575
        %v1580 = vmul.f32 %v1552, %v1575
        %v1581 = vmul.f32 %v1554, %v1575
        %v1582 = vmul.f32 %v1556, %v1575
        %v1583 = vmul.f32 %v1558, %v1575
        %v1584 = vmul.f32 %v1560, %v1575
        %v1585 = vmul.f32 %v1562, %v1575
        %v1586 = vmul.f32 %v1564, %v1575
        %v1587 = vmul.f32 %v1566, %v1575
        %v1588 = vmul.f32 %v1568, %v1575
        %v1589 = vmul.f32 %v1570, %v1575
        %v1590 = vmul.f32 %v1572, %v1575
        %v1591 = vmul.f32 %v1574, %v1575
        %v1592 = vadd.f32 %v1576, 1e-05
        %v1593 = vadd.f32 %v1577, 1e-05
        %v1594 = vadd.f32 %v1578, 1e-05
        %v1595 = vadd.f32 %v1579, 1e-05
        %v1596 = vadd.f32 %v1580, 1e-05
        %v1597 = vadd.f32 %v1581, 1e-05
        %v1598 = vadd.f32 %v1582, 1e-05
        %v1599 = vadd.f32 %v1583, 1e-05
        %v1600 = vadd.f32 %v1584, 1e-05
        %v1601 = vadd.f32 %v1585, 1e-05
        %v1602 = vadd.f32 %v1586, 1e-05
        %v1603 = vadd.f32 %v1587, 1e-05
        %v1604 = vadd.f32 %v1588, 1e-05
        %v1605 = vadd.f32 %v1589, 1e-05
        %v1606 = vadd.f32 %v1590, 1e-05
        %v1607 = vadd.f32 %v1591, 1e-05
        %v1608 = vrsqrt.pop %v1592
        %v1609 = vrsqrt.pop %v1593
        %v1610 = vrsqrt.pop %v1594
        %v1611 = vrsqrt.pop %v1595
        %v1612 = vrsqrt.pop %v1596
        %v1613 = vrsqrt.pop %v1597
        %v1614 = vrsqrt.pop %v1598
        %v1615 = vrsqrt.pop %v1599
        %v1616 = vrsqrt.pop %v1600
        %v1617 = vrsqrt.pop %v1601
        %v1618 = vrsqrt.pop %v1602
        %v1619 = vrsqrt.pop %v1603
        %v1620 = vrsqrt.pop %v1604
        %v1621 = vrsqrt.pop %v1605
        %v1622 = vrsqrt.pop %v1606
        %v1623 = vrsqrt.pop %v1607
        %v1624 = vmul.f32 %v1271, %v1608
        %v1625 = vmul.f32 %v1275, %v1609
        %v1626 = vmul.f32 %v1281, %v1610
        %v1627 = vmul.f32 %v1285, %v1611
        %v1628 = vmul.f32 %v1291, %v1612
        %v1629 = vmul.f32 %v1295, %v1613
        %v1630 = vmul.f32 %v1301, %v1614
        %v1631 = vmul.f32 %v1305, %v1615
        %v1632 = vmul.f32 %v1311, %v1616
        %v1633 = vmul.f32 %v1315, %v1617
        %v1634 = vmul.f32 %v1321, %v1618
        %v1635 = vmul.f32 %v1325, %v1619
        %v1636 = vmul.f32 %v1331, %v1620
        %v1637 = vmul.f32 %v1335, %v1621
        %v1638 = vmul.f32 %v1341, %v1622
        %v1639 = vmul.f32 %v1345, %v1623
        %v1641 = vlaneseq
        %v1642 = vshrl.u32 %v1641, 7
        %v1643 = vsub.s32 0, %v1642
        %v1644 = vrot.slane %v1526, %v1643
        %v1646 = vmul.f32 %v1624, %v1644
        %v1647 = vmul.f32 %v1625, %v1644
        %v1648 = vmul.f32 %v1626, %v1644
        %v1649 = vmul.f32 %v1627, %v1644
        %v1650 = vmul.f32 %v1628, %v1644
        %v1651 = vmul.f32 %v1629, %v1644
        %v1652 = vmul.f32 %v1630, %v1644
        %v1653 = vmul.f32 %v1631, %v1644
        %v1654 = vmul.f32 %v1632, %v1644
        %v1655 = vmul.f32 %v1633, %v1644
        %v1656 = vmul.f32 %v1634, %v1644
        %v1657 = vmul.f32 %v1635, %v1644
        %v1658 = vmul.f32 %v1636, %v1644
        %v1659 = vmul.f32 %v1637, %v1644
        %v1660 = vmul.f32 %v1638, %v1644
        %v1661 = vmul.f32 %v1639, %v1644
        %v1662 = vmul.f32 %v1646, %v1494
        %v1663 = vmul.f32 %v1647, %v1495
        %v1664 = vmul.f32 %v1648, %v1496
        %v1665 = vmul.f32 %v1649, %v1497
        %v1666 = vmul.f32 %v1650, %v1498
        %v1667 = vmul.f32 %v1651, %v1499
        %v1668 = vmul.f32 %v1652, %v1500
        %v1669 = vmul.f32 %v1653, %v1501
        %v1670 = vmul.f32 %v1654, %v1502
        %v1671 = vmul.f32 %v1655, %v1503
        %v1672 = vmul.f32 %v1656, %v1504
        %v1673 = vmul.f32 %v1657, %v1505
        %v1674 = vmul.f32 %v1658, %v1506
        %v1675 = vmul.f32 %v1659, %v1507
        %v1676 = vmul.f32 %v1660, %v1508
        %v1677 = vmul.f32 %v1661, %v1509
        %1678 = vrot.lane.b32.xlu0 %v1646, 64
        %v1679 = vpop.permute.xlu0 %1678
        %1680 = vrot.lane.b32.xlu0 %v1647, 64
        %v1681 = vpop.permute.xlu0 %1680
        %1682 = vrot.lane.b32.xlu0 %v1648, 64
        %v1683 = vpop.permute.xlu0 %1682
        %1684 = vrot.lane.b32.xlu0 %v1649, 64
        %v1685 = vpop.permute.xlu0 %1684
        %1686 = vrot.lane.b32.xlu0 %v1650, 64
        %v1687 = vpop.permute.xlu0 %1686
        %1688 = vrot.lane.b32.xlu0 %v1651, 64
        %v1689 = vpop.permute.xlu0 %1688
        %1690 = vrot.lane.b32.xlu0 %v1652, 64
        %v1691 = vpop.permute.xlu0 %1690
        %1692 = vrot.lane.b32.xlu0 %v1653, 64
        %v1693 = vpop.permute.xlu0 %1692
        %1694 = vrot.lane.b32.xlu0 %v1654, 64
        %v1695 = vpop.permute.xlu0 %1694
        %1696 = vrot.lane.b32.xlu0 %v1655, 64
        %v1697 = vpop.permute.xlu0 %1696
        %1698 = vrot.lane.b32.xlu0 %v1656, 64
        %v1699 = vpop.permute.xlu0 %1698
        %1700 = vrot.lane.b32.xlu0 %v1657, 64
        %v1701 = vpop.permute.xlu0 %1700
        %1702 = vrot.lane.b32.xlu0 %v1658, 64
        %v1703 = vpop.permute.xlu0 %1702
        %1704 = vrot.lane.b32.xlu0 %v1659, 64
        %v1705 = vpop.permute.xlu0 %1704
        %1706 = vrot.lane.b32.xlu0 %v1660, 64
        %v1707 = vpop.permute.xlu0 %1706
        %1708 = vrot.lane.b32.xlu0 %v1661, 64
        %v1709 = vpop.permute.xlu0 %1708
        %v1710 = vmul.f32 %v1679, %v1510
        %v1711 = vmul.f32 %v1681, %v1511
        %v1712 = vmul.f32 %v1683, %v1512
        %v1713 = vmul.f32 %v1685, %v1513
        %v1714 = vmul.f32 %v1687, %v1514
        %v1715 = vmul.f32 %v1689, %v1515
        %v1716 = vmul.f32 %v1691, %v1516
        %v1717 = vmul.f32 %v1693, %v1517
        %v1718 = vmul.f32 %v1695, %v1518
        %v1719 = vmul.f32 %v1697, %v1519
        %v1720 = vmul.f32 %v1699, %v1520
        %v1721 = vmul.f32 %v1701, %v1521
        %v1722 = vmul.f32 %v1703, %v1522
        %v1723 = vmul.f32 %v1705, %v1523
        %v1724 = vmul.f32 %v1707, %v1524
        %v1725 = vmul.f32 %v1709, %v1525
        %v1726 = vadd.f32 %v1662, %v1710
        %v1727 = vadd.f32 %v1663, %v1711
        %v1728 = vadd.f32 %v1664, %v1712
        %v1729 = vadd.f32 %v1665, %v1713
        %v1730 = vadd.f32 %v1666, %v1714
        %v1731 = vadd.f32 %v1667, %v1715
        %v1732 = vadd.f32 %v1668, %v1716
        %v1733 = vadd.f32 %v1669, %v1717
        %v1734 = vadd.f32 %v1670, %v1718
        %v1735 = vadd.f32 %v1671, %v1719
        %v1736 = vadd.f32 %v1672, %v1720
        %v1737 = vadd.f32 %v1673, %v1721
        %v1738 = vadd.f32 %v1674, %v1722
        %v1739 = vadd.f32 %v1675, %v1723
        %v1740 = vadd.f32 %v1676, %v1724
        %v1741 = vadd.f32 %v1677, %v1725
        %v1742 = vpack.c.bf16 %v1727, %v1726
        %v1743 = vpack.c.bf16 %v1729, %v1728
        %v1744 = vpack.c.bf16 %v1731, %v1730
        %v1745 = vpack.c.bf16 %v1733, %v1732
        %v1746 = vpack.c.bf16 %v1735, %v1734
        %v1747 = vpack.c.bf16 %v1737, %v1736
        %v1748 = vpack.c.bf16 %v1739, %v1738
        %v1749 = vpack.c.bf16 %v1741, %v1740
        %v1758 = vunpack.c.l.b16 %v1742
        %v1759 = vunpack.c.h.b16 %v1742
        %v1760 = vunpack.c.l.b16 %v1743
        %v1761 = vunpack.c.h.b16 %v1743
        %v1762 = vunpack.c.l.b16 %v1744
        %v1763 = vunpack.c.h.b16 %v1744
        %v1764 = vunpack.c.l.b16 %v1745
        %v1765 = vunpack.c.h.b16 %v1745
        %v1766 = vunpack.c.l.b16 %v1746
        %v1767 = vunpack.c.h.b16 %v1746
        %v1768 = vunpack.c.l.b16 %v1747
        %v1769 = vunpack.c.h.b16 %v1747
        %v1770 = vunpack.c.l.b16 %v1748
        %v1771 = vunpack.c.h.b16 %v1748
        %v1772 = vunpack.c.l.b16 %v1749
        %v1773 = vunpack.c.h.b16 %v1749
        %v1774 = vpack.c.b16 %v1758, %v1758
        %v1775 = vpack.c.b16 %v1759, %v1759
        %v1776 = vpack.c.b16 %v1760, %v1760
        %v1777 = vpack.c.b16 %v1761, %v1761
        %v1778 = vpack.c.b16 %v1762, %v1762
        %v1779 = vpack.c.b16 %v1763, %v1763
        %v1780 = vpack.c.b16 %v1764, %v1764
        %v1781 = vpack.c.b16 %v1765, %v1765
        %v1782 = vpack.c.b16 %v1766, %v1766
        %v1783 = vpack.c.b16 %v1767, %v1767
        %v1784 = vpack.c.b16 %v1768, %v1768
        %v1785 = vpack.c.b16 %v1769, %v1769
        %v1786 = vpack.c.b16 %v1770, %v1770
        %v1787 = vpack.c.b16 %v1771, %v1771
        %v1788 = vpack.c.b16 %v1772, %v1772
        %v1789 = vpack.c.b16 %v1773, %v1773
        %1806 = vst [vmem:[%s533] sm:$0xf] %v1774
        %1807 = vst [vmem:[%s533 + $0x4] sm:$0xf] %v1775
        %1808 = vst [vmem:[%s533 + $0x8] sm:$0xf] %v1776
        %1809 = vst [vmem:[%s533 + $0xc] sm:$0xf] %v1777
        %1810 = vst [vmem:[%s533 + $0x10] sm:$0xf] %v1778
        %1811 = vst [vmem:[%s533 + $0x14] sm:$0xf] %v1779
        %1812 = vst [vmem:[%s533 + $0x18] sm:$0xf] %v1780
        %1813 = vst [vmem:[%s533 + $0x1c] sm:$0xf] %v1781
        %1814 = vst [vmem:[%s533 + $0x20] sm:$0xf] %v1782
        %1815 = vst [vmem:[%s533 + $0x24] sm:$0xf] %v1783
        %1816 = vst [vmem:[%s533 + $0x28] sm:$0xf] %v1784
        %1817 = vst [vmem:[%s533 + $0x2c] sm:$0xf] %v1785
        %1818 = vst [vmem:[%s533 + $0x30] sm:$0xf] %v1786
        %1819 = vst [vmem:[%s533 + $0x34] sm:$0xf] %v1787
        %1820 = vst [vmem:[%s533 + $0x38] sm:$0xf] %v1788
        %1821 = vst [vmem:[%s533 + $0x3c] sm:$0xf] %v1789
        %v1822 = vld [vmem:[%s6] sm:$0x1]
        %v1823 = vmul.f32 %v1273, %v1273
        %v1824 = vmul.f32 %v1277, %v1277
        %v1825 = vmul.f32 %v1283, %v1283
        %v1826 = vmul.f32 %v1287, %v1287
        %v1827 = vmul.f32 %v1293, %v1293
        %v1828 = vmul.f32 %v1297, %v1297
        %v1829 = vmul.f32 %v1303, %v1303
        %v1830 = vmul.f32 %v1307, %v1307
        %v1831 = vmul.f32 %v1313, %v1313
        %v1832 = vmul.f32 %v1317, %v1317
        %v1833 = vmul.f32 %v1323, %v1323
        %v1834 = vmul.f32 %v1327, %v1327
        %v1835 = vmul.f32 %v1333, %v1333
        %v1836 = vmul.f32 %v1337, %v1337
        %v1837 = vmul.f32 %v1343, %v1343
        %v1838 = vmul.f32 %v1347, %v1347
        %1839 = vadd.xlane.f32.xlu0 %v1823
        %v1840 = vpop.xlane.xlu0 %1839
        %1841 = vadd.xlane.f32.xlu0 %v1824
        %v1842 = vpop.xlane.xlu0 %1841
        %1843 = vadd.xlane.f32.xlu0 %v1825
        %v1844 = vpop.xlane.xlu0 %1843
        %1845 = vadd.xlane.f32.xlu0 %v1826
        %v1846 = vpop.xlane.xlu0 %1845
        %1847 = vadd.xlane.f32.xlu0 %v1827
        %v1848 = vpop.xlane.xlu0 %1847
        %1849 = vadd.xlane.f32.xlu0 %v1828
        %v1850 = vpop.xlane.xlu0 %1849
        %1851 = vadd.xlane.f32.xlu0 %v1829
        %v1852 = vpop.xlane.xlu0 %1851
        %1853 = vadd.xlane.f32.xlu0 %v1830
        %v1854 = vpop.xlane.xlu0 %1853
        %1855 = vadd.xlane.f32.xlu0 %v1831
        %v1856 = vpop.xlane.xlu0 %1855
        %1857 = vadd.xlane.f32.xlu0 %v1832
        %v1858 = vpop.xlane.xlu0 %1857
        %1859 = vadd.xlane.f32.xlu0 %v1833
        %v1860 = vpop.xlane.xlu0 %1859
        %1861 = vadd.xlane.f32.xlu0 %v1834
        %v1862 = vpop.xlane.xlu0 %1861
        %1863 = vadd.xlane.f32.xlu0 %v1835
        %v1864 = vpop.xlane.xlu0 %1863
        %1865 = vadd.xlane.f32.xlu0 %v1836
        %v1866 = vpop.xlane.xlu0 %1865
        %1867 = vadd.xlane.f32.xlu0 %v1837
        %v1868 = vpop.xlane.xlu0 %1867
        %1869 = vadd.xlane.f32.xlu0 %v1838
        %v1870 = vpop.xlane.xlu0 %1869
        %v1871 = vmul.f32 %v1840, %v1575
        %v1872 = vmul.f32 %v1842, %v1575
        %v1873 = vmul.f32 %v1844, %v1575
        %v1874 = vmul.f32 %v1846, %v1575
        %v1875 = vmul.f32 %v1848, %v1575
        %v1876 = vmul.f32 %v1850, %v1575
        %v1877 = vmul.f32 %v1852, %v1575
        %v1878 = vmul.f32 %v1854, %v1575
        %v1879 = vmul.f32 %v1856, %v1575
        %v1880 = vmul.f32 %v1858, %v1575
        %v1881 = vmul.f32 %v1860, %v1575
        %v1882 = vmul.f32 %v1862, %v1575
        %v1883 = vmul.f32 %v1864, %v1575
        %v1884 = vmul.f32 %v1866, %v1575
        %v1885 = vmul.f32 %v1868, %v1575
        %v1886 = vmul.f32 %v1870, %v1575
        %v1887 = vadd.f32 %v1871, 1e-05
        %v1888 = vadd.f32 %v1872, 1e-05
        %v1889 = vadd.f32 %v1873, 1e-05
        %v1890 = vadd.f32 %v1874, 1e-05
        %v1891 = vadd.f32 %v1875, 1e-05
        %v1892 = vadd.f32 %v1876, 1e-05
        %v1893 = vadd.f32 %v1877, 1e-05
        %v1894 = vadd.f32 %v1878, 1e-05
        %v1895 = vadd.f32 %v1879, 1e-05
        %v1896 = vadd.f32 %v1880, 1e-05
        %v1897 = vadd.f32 %v1881, 1e-05
        %v1898 = vadd.f32 %v1882, 1e-05
        %v1899 = vadd.f32 %v1883, 1e-05
        %v1900 = vadd.f32 %v1884, 1e-05
        %v1901 = vadd.f32 %v1885, 1e-05
        %v1902 = vadd.f32 %v1886, 1e-05
        %v1903 = vrsqrt.pop %v1887
        %v1904 = vrsqrt.pop %v1888
        %v1905 = vrsqrt.pop %v1889
        %v1906 = vrsqrt.pop %v1890
        %v1907 = vrsqrt.pop %v1891
        %v1908 = vrsqrt.pop %v1892
        %v1909 = vrsqrt.pop %v1893
        %v1910 = vrsqrt.pop %v1894
        %v1911 = vrsqrt.pop %v1895
        %v1912 = vrsqrt.pop %v1896
        %v1913 = vrsqrt.pop %v1897
        %v1914 = vrsqrt.pop %v1898
        %v1915 = vrsqrt.pop %v1899
        %v1916 = vrsqrt.pop %v1900
        %v1917 = vrsqrt.pop %v1901
        %v1918 = vrsqrt.pop %v1902
        %v1919 = vmul.f32 %v1273, %v1903
        %v1920 = vmul.f32 %v1277, %v1904
        %v1921 = vmul.f32 %v1283, %v1905
        %v1922 = vmul.f32 %v1287, %v1906
        %v1923 = vmul.f32 %v1293, %v1907
        %v1924 = vmul.f32 %v1297, %v1908
        %v1925 = vmul.f32 %v1303, %v1909
        %v1926 = vmul.f32 %v1307, %v1910
        %v1927 = vmul.f32 %v1313, %v1911
        %v1928 = vmul.f32 %v1317, %v1912
        %v1929 = vmul.f32 %v1323, %v1913
        %v1930 = vmul.f32 %v1327, %v1914
        %v1931 = vmul.f32 %v1333, %v1915
        %v1932 = vmul.f32 %v1337, %v1916
        %v1933 = vmul.f32 %v1343, %v1917
        %v1934 = vmul.f32 %v1347, %v1918
        %v1936 = vlaneseq
        %v1937 = vshrl.u32 %v1936, 7
        %v1938 = vsub.s32 0, %v1937
        %v1939 = vrot.slane %v1822, %v1938
        %v1941 = vmul.f32 %v1919, %v1939
        %v1942 = vmul.f32 %v1920, %v1939
        %v1943 = vmul.f32 %v1921, %v1939
        %v1944 = vmul.f32 %v1922, %v1939
        %v1945 = vmul.f32 %v1923, %v1939
        %v1946 = vmul.f32 %v1924, %v1939
        %v1947 = vmul.f32 %v1925, %v1939
        %v1948 = vmul.f32 %v1926, %v1939
        %v1949 = vmul.f32 %v1927, %v1939
        %v1950 = vmul.f32 %v1928, %v1939
        %v1951 = vmul.f32 %v1929, %v1939
        %v1952 = vmul.f32 %v1930, %v1939
        %v1953 = vmul.f32 %v1931, %v1939
        %v1954 = vmul.f32 %v1932, %v1939
        %v1955 = vmul.f32 %v1933, %v1939
        %v1956 = vmul.f32 %v1934, %v1939
        %v1957 = vmul.f32 %v1941, %v1494
        %v1958 = vmul.f32 %v1942, %v1495
        %v1959 = vmul.f32 %v1943, %v1496
        %v1960 = vmul.f32 %v1944, %v1497
        %v1961 = vmul.f32 %v1945, %v1498
        %v1962 = vmul.f32 %v1946, %v1499
        %v1963 = vmul.f32 %v1947, %v1500
        %v1964 = vmul.f32 %v1948, %v1501
        %v1965 = vmul.f32 %v1949, %v1502
        %v1966 = vmul.f32 %v1950, %v1503
        %v1967 = vmul.f32 %v1951, %v1504
        %v1968 = vmul.f32 %v1952, %v1505
        %v1969 = vmul.f32 %v1953, %v1506
        %v1970 = vmul.f32 %v1954, %v1507
        %v1971 = vmul.f32 %v1955, %v1508
        %v1972 = vmul.f32 %v1956, %v1509
        %1973 = vrot.lane.b32.xlu0 %v1941, 64
        %v1974 = vpop.permute.xlu0 %1973
        %1975 = vrot.lane.b32.xlu0 %v1942, 64
        %v1976 = vpop.permute.xlu0 %1975
        %1977 = vrot.lane.b32.xlu0 %v1943, 64
        %v1978 = vpop.permute.xlu0 %1977
        %1979 = vrot.lane.b32.xlu0 %v1944, 64
        %v1980 = vpop.permute.xlu0 %1979
        %1981 = vrot.lane.b32.xlu0 %v1945, 64
        %v1982 = vpop.permute.xlu0 %1981
        %1983 = vrot.lane.b32.xlu0 %v1946, 64
        %v1984 = vpop.permute.xlu0 %1983
        %1985 = vrot.lane.b32.xlu0 %v1947, 64
        %v1986 = vpop.permute.xlu0 %1985
        %1987 = vrot.lane.b32.xlu0 %v1948, 64
        %v1988 = vpop.permute.xlu0 %1987
        %1989 = vrot.lane.b32.xlu0 %v1949, 64
        %v1990 = vpop.permute.xlu0 %1989
        %1991 = vrot.lane.b32.xlu0 %v1950, 64
        %v1992 = vpop.permute.xlu0 %1991
        %1993 = vrot.lane.b32.xlu0 %v1951, 64
        %v1994 = vpop.permute.xlu0 %1993
        %1995 = vrot.lane.b32.xlu0 %v1952, 64
        %v1996 = vpop.permute.xlu0 %1995
        %1997 = vrot.lane.b32.xlu0 %v1953, 64
        %v1998 = vpop.permute.xlu0 %1997
        %1999 = vrot.lane.b32.xlu0 %v1954, 64
        %v2000 = vpop.permute.xlu0 %1999
        %2001 = vrot.lane.b32.xlu0 %v1955, 64
        %v2002 = vpop.permute.xlu0 %2001
        %2003 = vrot.lane.b32.xlu0 %v1956, 64
        %v2004 = vpop.permute.xlu0 %2003
        %v2005 = vmul.f32 %v1974, %v1510
        %v2006 = vmul.f32 %v1976, %v1511
        %v2007 = vmul.f32 %v1978, %v1512
        %v2008 = vmul.f32 %v1980, %v1513
        %v2009 = vmul.f32 %v1982, %v1514
        %v2010 = vmul.f32 %v1984, %v1515
        %v2011 = vmul.f32 %v1986, %v1516
        %v2012 = vmul.f32 %v1988, %v1517
        %v2013 = vmul.f32 %v1990, %v1518
        %v2014 = vmul.f32 %v1992, %v1519
        %v2015 = vmul.f32 %v1994, %v1520
        %v2016 = vmul.f32 %v1996, %v1521
        %v2017 = vmul.f32 %v1998, %v1522
        %v2018 = vmul.f32 %v2000, %v1523
        %v2019 = vmul.f32 %v2002, %v1524
        %v2020 = vmul.f32 %v2004, %v1525
        %v2021 = vadd.f32 %v1957, %v2005
        %v2022 = vadd.f32 %v1958, %v2006
        %v2023 = vadd.f32 %v1959, %v2007
        %v2024 = vadd.f32 %v1960, %v2008
        %v2025 = vadd.f32 %v1961, %v2009
        %v2026 = vadd.f32 %v1962, %v2010
        %v2027 = vadd.f32 %v1963, %v2011
        %v2028 = vadd.f32 %v1964, %v2012
        %v2029 = vadd.f32 %v1965, %v2013
        %v2030 = vadd.f32 %v1966, %v2014
        %v2031 = vadd.f32 %v1967, %v2015
        %v2032 = vadd.f32 %v1968, %v2016
        %v2033 = vadd.f32 %v1969, %v2017
        %v2034 = vadd.f32 %v1970, %v2018
        %v2035 = vadd.f32 %v1971, %v2019
        %v2036 = vadd.f32 %v1972, %v2020
        %v2037 = vpack.c.bf16 %v2022, %v2021
        %v2038 = vpack.c.bf16 %v2024, %v2023
        %v2039 = vpack.c.bf16 %v2026, %v2025
        %v2040 = vpack.c.bf16 %v2028, %v2027
        %v2041 = vpack.c.bf16 %v2030, %v2029
        %v2042 = vpack.c.bf16 %v2032, %v2031
        %v2043 = vpack.c.bf16 %v2034, %v2033
        %v2044 = vpack.c.bf16 %v2036, %v2035
        %v2053 = vunpack.c.l.b16 %v2037
        %v2054 = vunpack.c.h.b16 %v2037
        %v2055 = vunpack.c.l.b16 %v2038
        %v2056 = vunpack.c.h.b16 %v2038
        %v2057 = vunpack.c.l.b16 %v2039
        %v2058 = vunpack.c.h.b16 %v2039
        %v2059 = vunpack.c.l.b16 %v2040
        %v2060 = vunpack.c.h.b16 %v2040
        %v2061 = vunpack.c.l.b16 %v2041
        %v2062 = vunpack.c.h.b16 %v2041
        %v2063 = vunpack.c.l.b16 %v2042
        %v2064 = vunpack.c.h.b16 %v2042
        %v2065 = vunpack.c.l.b16 %v2043
        %v2066 = vunpack.c.h.b16 %v2043
        %v2067 = vunpack.c.l.b16 %v2044
        %v2068 = vunpack.c.h.b16 %v2044
        %v2069 = vpack.c.b16 %v2053, %v2053
        %v2070 = vpack.c.b16 %v2054, %v2054
        %v2071 = vpack.c.b16 %v2055, %v2055
        %v2072 = vpack.c.b16 %v2056, %v2056
        %v2073 = vpack.c.b16 %v2057, %v2057
        %v2074 = vpack.c.b16 %v2058, %v2058
        %v2075 = vpack.c.b16 %v2059, %v2059
        %v2076 = vpack.c.b16 %v2060, %v2060
        %v2077 = vpack.c.b16 %v2061, %v2061
        %v2078 = vpack.c.b16 %v2062, %v2062
        %v2079 = vpack.c.b16 %v2063, %v2063
        %v2080 = vpack.c.b16 %v2064, %v2064
        %v2081 = vpack.c.b16 %v2065, %v2065
        %v2082 = vpack.c.b16 %v2066, %v2066
        %v2083 = vpack.c.b16 %v2067, %v2067
        %v2084 = vpack.c.b16 %v2068, %v2068
        %s2101 = scalar_lea.vmem %s533, 64 [#allocation11]
        %2102 = vst [vmem:[%s2101] sm:$0xf] %v2069
        %2103 = vst [vmem:[%s2101 + $0x4] sm:$0xf] %v2070
        %2104 = vst [vmem:[%s2101 + $0x8] sm:$0xf] %v2071
        %2105 = vst [vmem:[%s2101 + $0xc] sm:$0xf] %v2072
        %2106 = vst [vmem:[%s2101 + $0x10] sm:$0xf] %v2073
        %2107 = vst [vmem:[%s2101 + $0x14] sm:$0xf] %v2074
        %2108 = vst [vmem:[%s2101 + $0x18] sm:$0xf] %v2075
        %2109 = vst [vmem:[%s2101 + $0x1c] sm:$0xf] %v2076
        %2110 = vst [vmem:[%s2101 + $0x20] sm:$0xf] %v2077
        %2111 = vst [vmem:[%s2101 + $0x24] sm:$0xf] %v2078
        %2112 = vst [vmem:[%s2101 + $0x28] sm:$0xf] %v2079
        %2113 = vst [vmem:[%s2101 + $0x2c] sm:$0xf] %v2080
        %2114 = vst [vmem:[%s2101 + $0x30] sm:$0xf] %v2081
        %2115 = vst [vmem:[%s2101 + $0x34] sm:$0xf] %v2082
        %2116 = vst [vmem:[%s2101 + $0x38] sm:$0xf] %v2083
        %2117 = vst [vmem:[%s2101 + $0x3c] sm:$0xf] %v2084
        %v2118 = vld [vmem:[%s7] sm:$0x1]
        %v2119 = vmul.f32 %v1384, %v1384
        %v2120 = vmul.f32 %v1388, %v1388
        %v2121 = vmul.f32 %v1394, %v1394
        %v2122 = vmul.f32 %v1398, %v1398
        %v2123 = vmul.f32 %v1404, %v1404
        %v2124 = vmul.f32 %v1408, %v1408
        %v2125 = vmul.f32 %v1414, %v1414
        %v2126 = vmul.f32 %v1418, %v1418
        %v2127 = vmul.f32 %v1424, %v1424
        %v2128 = vmul.f32 %v1428, %v1428
        %v2129 = vmul.f32 %v1434, %v1434
        %v2130 = vmul.f32 %v1438, %v1438
        %v2131 = vmul.f32 %v1444, %v1444
        %v2132 = vmul.f32 %v1448, %v1448
        %v2133 = vmul.f32 %v1454, %v1454
        %v2134 = vmul.f32 %v1458, %v1458
        %2135 = vadd.xlane.f32.xlu0 %v2119
        %v2136 = vpop.xlane.xlu0 %2135
        %2137 = vadd.xlane.f32.xlu0 %v2120
        %v2138 = vpop.xlane.xlu0 %2137
        %2139 = vadd.xlane.f32.xlu0 %v2121
        %v2140 = vpop.xlane.xlu0 %2139
        %2141 = vadd.xlane.f32.xlu0 %v2122
        %v2142 = vpop.xlane.xlu0 %2141
        %2143 = vadd.xlane.f32.xlu0 %v2123
        %v2144 = vpop.xlane.xlu0 %2143
        %2145 = vadd.xlane.f32.xlu0 %v2124
        %v2146 = vpop.xlane.xlu0 %2145
        %2147 = vadd.xlane.f32.xlu0 %v2125
        %v2148 = vpop.xlane.xlu0 %2147
        %2149 = vadd.xlane.f32.xlu0 %v2126
        %v2150 = vpop.xlane.xlu0 %2149
        %2151 = vadd.xlane.f32.xlu0 %v2127
        %v2152 = vpop.xlane.xlu0 %2151
        %2153 = vadd.xlane.f32.xlu0 %v2128
        %v2154 = vpop.xlane.xlu0 %2153
        %2155 = vadd.xlane.f32.xlu0 %v2129
        %v2156 = vpop.xlane.xlu0 %2155
        %2157 = vadd.xlane.f32.xlu0 %v2130
        %v2158 = vpop.xlane.xlu0 %2157
        %2159 = vadd.xlane.f32.xlu0 %v2131
        %v2160 = vpop.xlane.xlu0 %2159
        %2161 = vadd.xlane.f32.xlu0 %v2132
        %v2162 = vpop.xlane.xlu0 %2161
        %2163 = vadd.xlane.f32.xlu0 %v2133
        %v2164 = vpop.xlane.xlu0 %2163
        %2165 = vadd.xlane.f32.xlu0 %v2134
        %v2166 = vpop.xlane.xlu0 %2165
        %v2167 = vmul.f32 %v2136, %v1575
        %v2168 = vmul.f32 %v2138, %v1575
        %v2169 = vmul.f32 %v2140, %v1575
        %v2170 = vmul.f32 %v2142, %v1575
        %v2171 = vmul.f32 %v2144, %v1575
        %v2172 = vmul.f32 %v2146, %v1575
        %v2173 = vmul.f32 %v2148, %v1575
        %v2174 = vmul.f32 %v2150, %v1575
        %v2175 = vmul.f32 %v2152, %v1575
        %v2176 = vmul.f32 %v2154, %v1575
        %v2177 = vmul.f32 %v2156, %v1575
        %v2178 = vmul.f32 %v2158, %v1575
        %v2179 = vmul.f32 %v2160, %v1575
        %v2180 = vmul.f32 %v2162, %v1575
        %v2181 = vmul.f32 %v2164, %v1575
        %v2182 = vmul.f32 %v2166, %v1575
        %v2183 = vadd.f32 %v2167, 1e-05
        %v2184 = vadd.f32 %v2168, 1e-05
        %v2185 = vadd.f32 %v2169, 1e-05
        %v2186 = vadd.f32 %v2170, 1e-05
        %v2187 = vadd.f32 %v2171, 1e-05
        %v2188 = vadd.f32 %v2172, 1e-05
        %v2189 = vadd.f32 %v2173, 1e-05
        %v2190 = vadd.f32 %v2174, 1e-05
        %v2191 = vadd.f32 %v2175, 1e-05
        %v2192 = vadd.f32 %v2176, 1e-05
        %v2193 = vadd.f32 %v2177, 1e-05
        %v2194 = vadd.f32 %v2178, 1e-05
        %v2195 = vadd.f32 %v2179, 1e-05
        %v2196 = vadd.f32 %v2180, 1e-05
        %v2197 = vadd.f32 %v2181, 1e-05
        %v2198 = vadd.f32 %v2182, 1e-05
        %v2199 = vrsqrt.pop %v2183
        %v2200 = vrsqrt.pop %v2184
        %v2201 = vrsqrt.pop %v2185
        %v2202 = vrsqrt.pop %v2186
        %v2203 = vrsqrt.pop %v2187
        %v2204 = vrsqrt.pop %v2188
        %v2205 = vrsqrt.pop %v2189
        %v2206 = vrsqrt.pop %v2190
        %v2207 = vrsqrt.pop %v2191
        %v2208 = vrsqrt.pop %v2192
        %v2209 = vrsqrt.pop %v2193
        %v2210 = vrsqrt.pop %v2194
        %v2211 = vrsqrt.pop %v2195
        %v2212 = vrsqrt.pop %v2196
        %v2213 = vrsqrt.pop %v2197
        %v2214 = vrsqrt.pop %v2198
        %v2215 = vmul.f32 %v1384, %v2199
        %v2216 = vmul.f32 %v1388, %v2200
        %v2217 = vmul.f32 %v1394, %v2201
        %v2218 = vmul.f32 %v1398, %v2202
        %v2219 = vmul.f32 %v1404, %v2203
        %v2220 = vmul.f32 %v1408, %v2204
        %v2221 = vmul.f32 %v1414, %v2205
        %v2222 = vmul.f32 %v1418, %v2206
        %v2223 = vmul.f32 %v1424, %v2207
        %v2224 = vmul.f32 %v1428, %v2208
        %v2225 = vmul.f32 %v1434, %v2209
        %v2226 = vmul.f32 %v1438, %v2210
        %v2227 = vmul.f32 %v1444, %v2211
        %v2228 = vmul.f32 %v1448, %v2212
        %v2229 = vmul.f32 %v1454, %v2213
        %v2230 = vmul.f32 %v1458, %v2214
        %v2232 = vlaneseq
        %v2233 = vshrl.u32 %v2232, 7
        %v2234 = vsub.s32 0, %v2233
        %v2235 = vrot.slane %v2118, %v2234
        %v2237 = vmul.f32 %v2215, %v2235
        %v2238 = vmul.f32 %v2216, %v2235
        %v2239 = vmul.f32 %v2217, %v2235
        %v2240 = vmul.f32 %v2218, %v2235
        %v2241 = vmul.f32 %v2219, %v2235
        %v2242 = vmul.f32 %v2220, %v2235
        %v2243 = vmul.f32 %v2221, %v2235
        %v2244 = vmul.f32 %v2222, %v2235
        %v2245 = vmul.f32 %v2223, %v2235
        %v2246 = vmul.f32 %v2224, %v2235
        %v2247 = vmul.f32 %v2225, %v2235
        %v2248 = vmul.f32 %v2226, %v2235
        %v2249 = vmul.f32 %v2227, %v2235
        %v2250 = vmul.f32 %v2228, %v2235
        %v2251 = vmul.f32 %v2229, %v2235
        %v2252 = vmul.f32 %v2230, %v2235
        %v2253 = vmul.f32 %v2237, %v1462
        %v2254 = vmul.f32 %v2238, %v1463
        %v2255 = vmul.f32 %v2239, %v1464
        %v2256 = vmul.f32 %v2240, %v1465
        %v2257 = vmul.f32 %v2241, %v1466
        %v2258 = vmul.f32 %v2242, %v1467
        %v2259 = vmul.f32 %v2243, %v1468
        %v2260 = vmul.f32 %v2244, %v1469
        %v2261 = vmul.f32 %v2245, %v1470
        %v2262 = vmul.f32 %v2246, %v1471
        %v2263 = vmul.f32 %v2247, %v1472
        %v2264 = vmul.f32 %v2248, %v1473
        %v2265 = vmul.f32 %v2249, %v1474
        %v2266 = vmul.f32 %v2250, %v1475
        %v2267 = vmul.f32 %v2251, %v1476
        %v2268 = vmul.f32 %v2252, %v1477
        %2269 = vrot.lane.b32.xlu0 %v2237, 64
        %v2270 = vpop.permute.xlu0 %2269
        %2271 = vrot.lane.b32.xlu0 %v2238, 64
        %v2272 = vpop.permute.xlu0 %2271
        %2273 = vrot.lane.b32.xlu0 %v2239, 64
        %v2274 = vpop.permute.xlu0 %2273
        %2275 = vrot.lane.b32.xlu0 %v2240, 64
        %v2276 = vpop.permute.xlu0 %2275
        %2277 = vrot.lane.b32.xlu0 %v2241, 64
        %v2278 = vpop.permute.xlu0 %2277
        %2279 = vrot.lane.b32.xlu0 %v2242, 64
        %v2280 = vpop.permute.xlu0 %2279
        %2281 = vrot.lane.b32.xlu0 %v2243, 64
        %v2282 = vpop.permute.xlu0 %2281
        %2283 = vrot.lane.b32.xlu0 %v2244, 64
        %v2284 = vpop.permute.xlu0 %2283
        %2285 = vrot.lane.b32.xlu0 %v2245, 64
        %v2286 = vpop.permute.xlu0 %2285
        %2287 = vrot.lane.b32.xlu0 %v2246, 64
        %v2288 = vpop.permute.xlu0 %2287
        %2289 = vrot.lane.b32.xlu0 %v2247, 64
        %v2290 = vpop.permute.xlu0 %2289
        %2291 = vrot.lane.b32.xlu0 %v2248, 64
        %v2292 = vpop.permute.xlu0 %2291
        %2293 = vrot.lane.b32.xlu0 %v2249, 64
        %v2294 = vpop.permute.xlu0 %2293
        %2295 = vrot.lane.b32.xlu0 %v2250, 64
        %v2296 = vpop.permute.xlu0 %2295
        %2297 = vrot.lane.b32.xlu0 %v2251, 64
        %v2298 = vpop.permute.xlu0 %2297
        %2299 = vrot.lane.b32.xlu0 %v2252, 64
        %v2300 = vpop.permute.xlu0 %2299
        %v2301 = vmul.f32 %v2270, %v1478
        %v2302 = vmul.f32 %v2272, %v1479
        %v2303 = vmul.f32 %v2274, %v1480
        %v2304 = vmul.f32 %v2276, %v1481
        %v2305 = vmul.f32 %v2278, %v1482
        %v2306 = vmul.f32 %v2280, %v1483
        %v2307 = vmul.f32 %v2282, %v1484
        %v2308 = vmul.f32 %v2284, %v1485
        %v2309 = vmul.f32 %v2286, %v1486
        %v2310 = vmul.f32 %v2288, %v1487
        %v2311 = vmul.f32 %v2290, %v1488
        %v2312 = vmul.f32 %v2292, %v1489
        %v2313 = vmul.f32 %v2294, %v1490
        %v2314 = vmul.f32 %v2296, %v1491
        %v2315 = vmul.f32 %v2298, %v1492
        %v2316 = vmul.f32 %v2300, %v1493
        %v2317 = vadd.f32 %v2253, %v2301
        %v2318 = vadd.f32 %v2254, %v2302
        %v2319 = vadd.f32 %v2255, %v2303
        %v2320 = vadd.f32 %v2256, %v2304
        %v2321 = vadd.f32 %v2257, %v2305
        %v2322 = vadd.f32 %v2258, %v2306
        %v2323 = vadd.f32 %v2259, %v2307
        %v2324 = vadd.f32 %v2260, %v2308
        %v2325 = vadd.f32 %v2261, %v2309
        %v2326 = vadd.f32 %v2262, %v2310
        %v2327 = vadd.f32 %v2263, %v2311
        %v2328 = vadd.f32 %v2264, %v2312
        %v2329 = vadd.f32 %v2265, %v2313
        %v2330 = vadd.f32 %v2266, %v2314
        %v2331 = vadd.f32 %v2267, %v2315
        %v2332 = vadd.f32 %v2268, %v2316
        %v2333 = vpack.c.bf16 %v2318, %v2317
        %v2334 = vpack.c.bf16 %v2320, %v2319
        %v2335 = vpack.c.bf16 %v2322, %v2321
        %v2336 = vpack.c.bf16 %v2324, %v2323
        %v2337 = vpack.c.bf16 %v2326, %v2325
        %v2338 = vpack.c.bf16 %v2328, %v2327
        %v2339 = vpack.c.bf16 %v2330, %v2329
        %v2340 = vpack.c.bf16 %v2332, %v2331
        %v2349 = vunpack.c.l.b16 %v2333
        %v2350 = vunpack.c.h.b16 %v2333
        %v2351 = vunpack.c.l.b16 %v2334
        %v2352 = vunpack.c.h.b16 %v2334
        %v2353 = vunpack.c.l.b16 %v2335
        %v2354 = vunpack.c.h.b16 %v2335
        %v2355 = vunpack.c.l.b16 %v2336
        %v2356 = vunpack.c.h.b16 %v2336
        %v2357 = vunpack.c.l.b16 %v2337
        %v2358 = vunpack.c.h.b16 %v2337
        %v2359 = vunpack.c.l.b16 %v2338
        %v2360 = vunpack.c.h.b16 %v2338
        %v2361 = vunpack.c.l.b16 %v2339
        %v2362 = vunpack.c.h.b16 %v2339
        %v2363 = vunpack.c.l.b16 %v2340
        %v2364 = vunpack.c.h.b16 %v2340
        %v2365 = vpack.c.b16 %v2349, %v2349
        %v2366 = vpack.c.b16 %v2350, %v2350
        %v2367 = vpack.c.b16 %v2351, %v2351
        %v2368 = vpack.c.b16 %v2352, %v2352
        %v2369 = vpack.c.b16 %v2353, %v2353
        %v2370 = vpack.c.b16 %v2354, %v2354
        %v2371 = vpack.c.b16 %v2355, %v2355
        %v2372 = vpack.c.b16 %v2356, %v2356
        %v2373 = vpack.c.b16 %v2357, %v2357
        %v2374 = vpack.c.b16 %v2358, %v2358
        %v2375 = vpack.c.b16 %v2359, %v2359
        %v2376 = vpack.c.b16 %v2360, %v2360
        %v2377 = vpack.c.b16 %v2361, %v2361
        %v2378 = vpack.c.b16 %v2362, %v2362
        %v2379 = vpack.c.b16 %v2363, %v2363
        %v2380 = vpack.c.b16 %v2364, %v2364
        %2397 = vst [vmem:[%s540] sm:$0xf] %v2365
        %2398 = vst [vmem:[%s540 + $0x4] sm:$0xf] %v2366
        %2399 = vst [vmem:[%s540 + $0x8] sm:$0xf] %v2367
        %2400 = vst [vmem:[%s540 + $0xc] sm:$0xf] %v2368
        %2401 = vst [vmem:[%s540 + $0x10] sm:$0xf] %v2369
        %2402 = vst [vmem:[%s540 + $0x14] sm:$0xf] %v2370
        %2403 = vst [vmem:[%s540 + $0x18] sm:$0xf] %v2371
        %2404 = vst [vmem:[%s540 + $0x1c] sm:$0xf] %v2372
        %2405 = vst [vmem:[%s540 + $0x20] sm:$0xf] %v2373
        %2406 = vst [vmem:[%s540 + $0x24] sm:$0xf] %v2374
        %2407 = vst [vmem:[%s540 + $0x28] sm:$0xf] %v2375
        %2408 = vst [vmem:[%s540 + $0x2c] sm:$0xf] %v2376
        %2409 = vst [vmem:[%s540 + $0x30] sm:$0xf] %v2377
        %2410 = vst [vmem:[%s540 + $0x34] sm:$0xf] %v2378
        %2411 = vst [vmem:[%s540 + $0x38] sm:$0xf] %v2379
        %2412 = vst [vmem:[%s540 + $0x3c] sm:$0xf] %v2380
        %v2413 = vpack.c.bf16 %v1390, %v1386
        %v2414 = vpack.c.bf16 %v1400, %v1396
        %v2415 = vpack.c.bf16 %v1410, %v1406
        %v2416 = vpack.c.bf16 %v1420, %v1416
        %v2417 = vpack.c.bf16 %v1430, %v1426
        %v2418 = vpack.c.bf16 %v1440, %v1436
        %v2419 = vpack.c.bf16 %v1450, %v1446
        %v2420 = vpack.c.bf16 %v1460, %v1456
        %v2429 = vunpack.c.l.b16 %v2413
        %v2430 = vunpack.c.h.b16 %v2413
        %v2431 = vunpack.c.l.b16 %v2414
        %v2432 = vunpack.c.h.b16 %v2414
        %v2433 = vunpack.c.l.b16 %v2415
        %v2434 = vunpack.c.h.b16 %v2415
        %v2435 = vunpack.c.l.b16 %v2416
        %v2436 = vunpack.c.h.b16 %v2416
        %v2437 = vunpack.c.l.b16 %v2417
        %v2438 = vunpack.c.h.b16 %v2417
        %v2439 = vunpack.c.l.b16 %v2418
        %v2440 = vunpack.c.h.b16 %v2418
        %v2441 = vunpack.c.l.b16 %v2419
        %v2442 = vunpack.c.h.b16 %v2419
        %v2443 = vunpack.c.l.b16 %v2420
        %v2444 = vunpack.c.h.b16 %v2420
        %v2445 = vpack.c.b16 %v2429, %v2429
        %v2446 = vpack.c.b16 %v2430, %v2430
        %v2447 = vpack.c.b16 %v2431, %v2431
        %v2448 = vpack.c.b16 %v2432, %v2432
        %v2449 = vpack.c.b16 %v2433, %v2433
        %v2450 = vpack.c.b16 %v2434, %v2434
        %v2451 = vpack.c.b16 %v2435, %v2435
        %v2452 = vpack.c.b16 %v2436, %v2436
        %v2453 = vpack.c.b16 %v2437, %v2437
        %v2454 = vpack.c.b16 %v2438, %v2438
        %v2455 = vpack.c.b16 %v2439, %v2439
        %v2456 = vpack.c.b16 %v2440, %v2440
        %v2457 = vpack.c.b16 %v2441, %v2441
        %v2458 = vpack.c.b16 %v2442, %v2442
        %v2459 = vpack.c.b16 %v2443, %v2443
        %v2460 = vpack.c.b16 %v2444, %v2444
        %2477 = vst [vmem:[%s547] sm:$0xf] %v2445
        %2478 = vst [vmem:[%s547 + $0x4] sm:$0xf] %v2446
        %2479 = vst [vmem:[%s547 + $0x8] sm:$0xf] %v2447
        %2480 = vst [vmem:[%s547 + $0xc] sm:$0xf] %v2448
        %2481 = vst [vmem:[%s547 + $0x10] sm:$0xf] %v2449
        %2482 = vst [vmem:[%s547 + $0x14] sm:$0xf] %v2450
        %2483 = vst [vmem:[%s547 + $0x18] sm:$0xf] %v2451
        %2484 = vst [vmem:[%s547 + $0x1c] sm:$0xf] %v2452
        %2485 = vst [vmem:[%s547 + $0x20] sm:$0xf] %v2453
        %2486 = vst [vmem:[%s547 + $0x24] sm:$0xf] %v2454
        %2487 = vst [vmem:[%s547 + $0x28] sm:$0xf] %v2455
        %2488 = vst [vmem:[%s547 + $0x2c] sm:$0xf] %v2456
        %2489 = vst [vmem:[%s547 + $0x30] sm:$0xf] %v2457
        %2490 = vst [vmem:[%s547 + $0x34] sm:$0xf] %v2458
        %2491 = vst [vmem:[%s547 + $0x38] sm:$0xf] %v2459
        %2492 = vst [vmem:[%s547 + $0x3c] sm:$0xf] %v2460
        %s2493 = sand.u32 %s249, 1
        %s2494 = scalar_lea.sflag [#allocation4], %s2493
        %s2495 = sand.u32 %s249, 1
        %s2496 = smul.addr %s2495, 128
        %s2497 = scalar_lea.vmem [#allocation11], %s2496
        %s2498 = sand.u32 %s37, 1
        %s2499 = scalar_lea.sflag [#allocation13], %s2498
        %s2500 = sand.u32 %s277, 1
        %s2501 = smul.addr %s2500, 64
        %s2502 = scalar_lea.vmem [#allocation12], %s2501
        %s2503 = sand.u32 %s37, 1
        %s2504 = scalar_lea.sflag [#allocation13], %s2503
        %s2505 = sand.u32 %s305, 1
        %s2506 = smul.addr %s2505, 64
        %s2507 = scalar_lea.vmem [#allocation14], %s2506
        // Predicated region
        $region73: #{tpu_custom_call.1} parent=51 // pred_check
          %p2508 = pneg %p259
        $region74: #{tpu_custom_call.1} parent=51 // pred_check_branch
          %2510 = sbr.rel (%p2508) target = $region76
        $region75: #{tpu_custom_call.1} parent=51 // pred_region
          #allocation16 [shape = 'u32[6]{0}', space=smem, size = 0x18, scoped, tag = 'DMA stride descriptor']
          %s2511 = smul.u32 16, %s42
          %s2513 = ssub.s32 2048, 2048
          %2514 = vsyncadd %s2494, %s2513
          %s2515 = smul.addr %s41, 64
          %s2516 = sadd.s32 %s2511, %s2515
          %s2517 = smul.addr %s2516, 64
          %s2518 = scalar_lea.hbm %s8, %s2517
          %s2520 = sshll.u32 1, 14
          %s2521 = sxor.u32 4294967295, %s2520
          %s2524 = sshll.u32 7, 18
          %s2525 = sxor.u32 4294967295, %s2524
          %s2526 = sand.u32 0, %s2525
          %s2528 = sor.u32 %s2526, 0
          %s2529 = sshll.u32 %s2497, 4
          %s2530 = int_to_ptr.vmem [resolvable:$true] %s2529
          %2536 = sst [smem:[#allocation16]] 1024
          %s2537 = scalar_lea.smem [#allocation16], 1
          %2538 = sst [smem:[%s2537]] 2048
          %s2539 = scalar_lea.smem [#allocation16], 2
          %2540 = sst [smem:[%s2539]] 16
          %s2541 = scalar_lea.smem [#allocation16], 3
          %2542 = sst [smem:[%s2541]] 64
          %s2543 = scalar_lea.smem [#allocation16], 4
          %2544 = sst [smem:[%s2543]] 64
          %s2545 = scalar_lea.smem [#allocation16], 5
          %2546 = sst [smem:[%s2545]] 4
          %2548 = dma.general %s2530, 2048, %s2518, %s2494, 131072, [#allocation16], %s2528, 0
        $region76: #{tpu_custom_call.1} parent=51 // pred_fallthru
          _
        // Predicated region
        $region77: #{tpu_custom_call.1} parent=51 // pred_check
          %p2549 = pneg %p287
        $region78: #{tpu_custom_call.1} parent=51 // pred_check_branch
          %2551 = sbr.rel (%p2549) target = $region80
        $region79: #{tpu_custom_call.1} parent=51 // pred_region
          %s2552 = smul.u32 16, %s42
          %s2554 = ssub.s32 1024, 1024
          %2555 = vsyncadd %s2499, %s2554
          %s2556 = smul.addr %s41, 32
          %s2557 = sadd.s32 %s2552, %s2556
          %s2558 = smul.addr %s2557, 64
          %s2559 = scalar_lea.hbm %s9, %s2558
          %s2560 = sshll.u32 %s2502, 4
          %s2561 = int_to_ptr.vmem [resolvable:$true] %s2560
          %2566 = dma.vmem_to_hbm [thread:$0]  %s2561, 1024, %s2559, %s2499, 64, 64, 4
        $region80: #{tpu_custom_call.1} parent=51 // pred_fallthru
          _
        // Predicated region
        $region81: #{tpu_custom_call.1} parent=51 // pred_check
          %p2567 = pneg %p315
        $region82: #{tpu_custom_call.1} parent=51 // pred_check_branch
          %2569 = sbr.rel (%p2567) target = $region84
        $region83: #{tpu_custom_call.1} parent=51 // pred_region
          %s2570 = smul.u32 16, %s42
          %s2572 = ssub.s32 1024, 1024
          %2573 = vsyncadd %s2504, %s2572
          %s2574 = smul.addr %s41, 32
          %s2575 = sadd.s32 %s2570, %s2574
          %s2576 = smul.addr %s2575, 64
          %s2577 = scalar_lea.hbm %s10, %s2576
          %s2578 = sshll.u32 %s2507, 4
          %s2579 = int_to_ptr.vmem [resolvable:$true] %s2578
          %2584 = dma.vmem_to_hbm [thread:$0]  %s2579, 1024, %s2577, %s2504, 64, 64, 4
        $region84: #{tpu_custom_call.1} parent=51 // pred_fallthru
          _
      $region52: #{tpu_custom_call.1} parent=5 // pred_fallthru
        _
      %p2585 = scmp.le.s32.totalorder 2, %s32
      // Predicated region
      $region85: #{tpu_custom_call.1} parent=5 // pred_check
        %p2586 = pneg %p2585
      $region86: #{tpu_custom_call.1} parent=5 // pred_check_branch
        %2588 = sbr.rel (%p2586) target = $region88
      $region87: #{tpu_custom_call.1} parent=5 // pred_region
        %s2589 = ssub.s32 %s32, 2
        // Predicated region
        $region89: #{tpu_custom_call.1} parent=87 // pred_check
          %p2590 = pneg %p265
        $region90: #{tpu_custom_call.1} parent=87 // pred_check_branch
          %2592 = sbr.rel (%p2590) target = $region92
        $region91: #{tpu_custom_call.1} parent=87 // pred_region
          %s2593 = sand.u32 %s250, 1
          %s2594 = scalar_lea.sflag [#allocation4], %s2593
          %s2595 = sand.u32 %s250, 1
          %s2596 = smul.addr %s2595, 128
          %s2597 = scalar_lea.vmem [#allocation11], %s2596
          %2598 = dma.done %s2594, 2048
        $region92: #{tpu_custom_call.1} parent=87 // pred_fallthru
          _
        // Predicated region
        $region93: #{tpu_custom_call.1} parent=87 // pred_check
          %p2599 = pneg %p293
        $region94: #{tpu_custom_call.1} parent=87 // pred_check_branch
          %2601 = sbr.rel (%p2599) target = $region96
        $region95: #{tpu_custom_call.1} parent=87 // pred_region
          %s2602 = sand.u32 %s38, 1
          %s2603 = scalar_lea.sflag [#allocation13], %s2602
          %s2604 = sand.u32 %s278, 1
          %s2605 = smul.addr %s2604, 64
          %s2606 = scalar_lea.vmem [#allocation12], %s2605
          %2607 = dma.done %s2603, 1024
        $region96: #{tpu_custom_call.1} parent=87 // pred_fallthru
          _
        // Predicated region
        $region97: #{tpu_custom_call.1} parent=87 // pred_check
          %p2608 = pneg %p321
        $region98: #{tpu_custom_call.1} parent=87 // pred_check_branch
          %2610 = sbr.rel (%p2608) target = $region100
        $region99: #{tpu_custom_call.1} parent=87 // pred_region
          %s2611 = sand.u32 %s38, 1
          %s2612 = scalar_lea.sflag [#allocation13], %s2611
          %s2613 = sand.u32 %s306, 1
          %s2614 = smul.addr %s2613, 64
          %s2615 = scalar_lea.vmem [#allocation14], %s2614
          %2616 = dma.done %s2612, 1024
        $region100: #{tpu_custom_call.1} parent=87 // pred_fallthru
          _
      $region88: #{tpu_custom_call.1} parent=5 // pred_fallthru
        _
    $region6: #{tpu_custom_call.1} parent=1 // loop_footer
      %s36 = sadd.s32 1, %s32
    $region7: #{tpu_custom_call.1} parent=1 // loop_footer_branch
      %31 = sbr.rel target = $region3
    $region8: #{tpu_custom_call.1} parent=1 // loop_exit
      _
    %2617 = vsyncpa [#allocation3], 1
    %s2618 = scalar_lea.sflag [#allocation3], 1
    %2619 = vsyncpa %s2618, 1
    %2620 = vsyncpa [#allocation6], 1
    %s2621 = scalar_lea.sflag [#allocation6], 1
    %2622 = vsyncpa %s2621, 1
    %2623 = vsyncpa [#allocation9], 1
    %s2624 = scalar_lea.sflag [#allocation9], 1
    %2625 = vsyncpa %s2624, 1
    %2626 = vsyncpa [#allocation4], 1
    %s2627 = scalar_lea.sflag [#allocation4], 1
    %2628 = vsyncpa %s2627, 1
    %2629 = vsyncpa [#allocation13], 1
    %s2630 = scalar_lea.sflag [#allocation13], 1
    %2631 = vsyncpa %s2630, 1

</llo_original>
